<compile_context>
chip_gen: v6e
topology: v6e:2x2x1
jax: 0.10.0
libtpu: 0.0.40
codegen_flags: <defaults>
</compile_context>

<pallas_src>
import math
import functools

import jax
import jax.numpy as jnp
from jax import lax
from jax.experimental import pallas as pl
from jax.experimental.pallas import tpu as pltpu


def _relative_bucket_weights(qs, ks, num_buckets, max_distance):
    """Batch-independent graph weights 1/(bucket+1), pre-mask.  Computed once."""
    ctx = jnp.arange(qs, dtype=jnp.int32)[:, None]
    mem = jnp.arange(ks, dtype=jnp.int32)[None, :]
    rel = jnp.abs(mem - ctx)                               # bidirectional (not decoder)
    max_exact = num_buckets // 2
    is_small = rel < max_exact
    rel_f = jnp.maximum(rel, 1).astype(jnp.float32)        # clamp avoids log(0); gated
    rel_large = max_exact + (
        jnp.log(rel_f / max_exact) / math.log(max_distance / max_exact)
        * (num_buckets - max_exact)).astype(jnp.int32)
    rel_large = jnp.minimum(rel_large, num_buckets - 1)
    buckets = jnp.where(is_small, rel, rel_large)
    return 1.0 / (buckets.astype(jnp.float32) + 1.0)       # (qs, ks) f32


def _graphrel_kernel(q_ref, kv_ref, mask_ref, dist_ref,
                     wq_ref, wkv_ref, wgo_ref, gamma_ref, beta_ref,
                     out_ref, newmem_ref, *rest,
                     n_head, head_dim, ln_eps, mxu_dtype, with_score, approx_recip):
    if with_score:
        score_ref = rest[0]
        qh_s, kh_s, vh_s, att_s = rest[1:]
    else:
        score_ref = None
        qh_s, kh_s, vh_s, att_s = rest

    B, TQ, H = q_ref.shape
    KS = kv_ref.shape[1]
    d = head_dim
    hd = n_head * head_dim
    scale = 1.0 / (head_dim ** 0.5)

    q = q_ref[...]                                         # (B, TQ, H)  f32
    kv = kv_ref[...]                                       # (B, KS, H)  f32
    maskb = mask_ref[...] != 0                             # (B, TQ, KS) bool (int8 in)
    dist0 = dist_ref[...]                                  # (TQ, KS)    f32 (pre-mask)

    wq = wq_ref[...]                                       # bf16 weights
    wgo = wgo_ref[...]

    kv_lp = kv.astype(mxu_dtype)                           # reused by graph branch

    # ---- query projection: one fat MXU matmul per q tile, f32 accumulation ----
    q2 = q.reshape(B * TQ, H).astype(mxu_dtype)
    query = jnp.dot(q2, wq, preferred_element_type=jnp.float32)         # (B*TQ, hd) f32
    query_lp = query.astype(mxu_dtype)                     # single wide cast (hoisted)

    # ---- K/V projection + new_mem + K/V head scatter: ONCE per batch block ----
    # kh_s / vh_s scratch and the resident new_mem output block persist across the
    # q ("arbitrary") grid axis, so this work is skipped for q tiles > 0.
    @pl.when(pl.program_id(1) == 0)
    def _kv_once():
        kv_proj = jnp.dot(kv_lp.reshape(B * KS, H), wkv_ref[...],
                          preferred_element_type=jnp.float32)           # (B*KS, 2hd)
        # new memory: two slab stores, no concatenate
        newmem_ref[:, :, : 2 * hd] = kv_proj.reshape(B, KS, 2 * hd)
        newmem_ref[:, :, 2 * hd:] = kv
        kvp_lp = kv_proj.astype(mxu_dtype)                 # single wide cast (hoisted)
        for b in range(B):
            for n in range(n_head):
                i = b * n_head + n
                kh_s[i] = kvp_lp[b * KS:(b + 1) * KS, n * d:(n + 1) * d]
                vh_s[i] = kvp_lp[b * KS:(b + 1) * KS,
                                 hd + n * d: hd + (n + 1) * d]

    # ---- scatter Q into head-major scratch (per q tile; ld/st only, no XLU) ----
    for b in range(B):
        for n in range(n_head):
            qh_s[b * n_head + n] = query_lp[b * TQ:(b + 1) * TQ, n * d:(n + 1) * d]

    # ---- head-batched QK^T: one batched MXU dot, no per-head transposes ----
    s3 = jnp.einsum('nqd,nkd->nqk', qh_s[...], kh_s[...],
                    preferred_element_type=jnp.float32)                 # (B*n, TQ, KS)
    s4 = (s3 * scale).reshape(B, n_head, TQ, KS)
    mask4 = jnp.broadcast_to(maskb[:, None, :, :], s4.shape)
    s4 = jnp.where(mask4, -60000.0, s4)
    if with_score:
        # reference returns the masked, scaled (pre-softmax) score as att_prob
        score_ref[...] = s4.astype(score_ref.dtype)

    # ---- softmax over keys (f32 stats; EUP reciprocal) ----
    m = jnp.max(s4, axis=-1, keepdims=True)
    e = jnp.exp(s4 - m)
    denom = jnp.sum(e, axis=-1, keepdims=True)
    p = e * pl.reciprocal(denom, approx=approx_recip)

    # ---- head-batched PV: one batched MXU dot ----
    p3 = p.reshape(B * n_head, TQ, KS).astype(mxu_dtype)
    att_h = jnp.einsum('nqk,nkd->nqd', p3, vh_s[...],
                       preferred_element_type=jnp.float32)              # (B*n, TQ, d)

    # gather heads back to (B*TQ, hd) via lane-sliced stores (no concatenate)
    for b in range(B):
        for n in range(n_head):
            att_s[b * TQ:(b + 1) * TQ, n * d:(n + 1) * d] = att_h[b * n_head + n]

    # ---- graph branch: hoisted bucket table, per-batch row normalization ----
    dist = jnp.where(maskb, 0.0, dist0[None, :, :])                     # (B, TQ, KS)
    degree = jnp.sum(dist, axis=-1, keepdims=True)                      # (B, TQ, 1)
    w = dist * pl.reciprocal(degree, approx=approx_recip)
    g = jnp.einsum('bqk,bkh->bqh', w.astype(mxu_dtype), kv_lp,
                   preferred_element_type=jnp.float32)                  # (B, TQ, H)
    graph_out = jnp.dot(g.reshape(B * TQ, H).astype(mxu_dtype), wgo,
                        preferred_element_type=jnp.float32)             # (B*TQ, H)

    # ---- residual + LayerNorm (post-norm, eps=1e-5, biased variance), f32 ----
    pre = query + att_s[...] + graph_out                                # (B*TQ, H)
    mu = jnp.mean(pre, axis=-1, keepdims=True)
    var = jnp.mean((pre - mu) ** 2, axis=-1, keepdims=True)
    normed = (pre - mu) * lax.rsqrt(var + ln_eps)
    out = normed * gamma_ref[0] + beta_ref[0]
    out_ref[...] = out.reshape(B, TQ, H)


def _vmem_capacity_bytes():
    try:
        return int(pltpu.get_tpu_info().vmem_capacity_bytes)
    except Exception:
        return 64 << 20          # conservative (v7x per-TC VMEM)


def _vmem_footprint(B, TQ, KS, H, hd, n_head, head_dim, score_bytes, with_score,
                    mxu_bytes=2):
    """Rough per-grid-step VMEM footprint (double-buffered blocks + scratch + temps)."""
    dbl = 2
    in_bytes = dbl * (B * TQ * H * 4            # q block
                      + B * KS * H * 4          # kv block
                      + B * TQ * KS * 1         # int8 mask
                      + TQ * KS * 4             # dist table
                      + H * hd * mxu_bytes      # Wq
                      + H * 2 * hd * mxu_bytes  # Wkv
                      + H * H * mxu_bytes       # Wgo
                      + 2 * H * 4)              # gamma/beta
    out_bytes = dbl * (B * TQ * H * 4
                       + B * KS * (2 * hd + H) * 4
                       + (B * n_head * TQ * KS * score_bytes if with_score else 0))
    scratch = ((B * n_head * TQ * head_dim
                + 2 * B * n_head * KS * head_dim) * mxu_bytes
               + B * TQ * hd * 4)
    # compiler temporaries: projections + score/softmax chain (rough 2-3x of scratch)
    temps = (B * TQ * hd * 4 + B * KS * 2 * hd * 4
             + 3 * B * n_head * TQ * KS * 4 + 2 * B * TQ * H * 4)
    return in_bytes + out_bytes + scratch + temps


def _select_blocks(bs, QS, KS, H, hd, n_head, head_dim, score_bytes, with_score,
                   budget):
    """Pick (block_b, block_q) under a VMEM budget; keep >=2 batch blocks when bs>1."""
    bq_cands = [d for d in range(min(QS, 512), 0, -1)
                if QS % d == 0 and (d == QS or d % 8 == 0)]
    if not bq_cands:
        bq_cands = [QS]
    bb_cap = 1 if bs == 1 else max(1, min(8, bs // 2))     # >=2 parallel grid steps
    bb_cands = [d for d in range(bb_cap, 0, -1) if bs % d == 0]
    for bb in bb_cands:
        for bq in bq_cands:
            if bb > 1 and not (bq % 8 == 0 and KS % 8 == 0):
                continue
            if _vmem_footprint(bb, bq, KS, H, hd, n_head, head_dim,
                               score_bytes, with_score) <= budget:
                return bb, bq
    return 1, bq_cands[-1]


def graphrel_multihead_att(q, kv, mask, params, *, n_head, head_dim,
                           num_buckets=128, max_distance=512,
                           block_b=None, block_q=None,
                           compute_dtype=jnp.bfloat16,
                           att_prob_layout="bnqk",       # kernel-native, lane-dense
                           score_dtype=jnp.float32,
                           return_att_prob=True,
                           approx_recip=True):
    """Pallas implementation of GraphRelMultiheadAtt.forward(q, kv, mem=None, mask)."""
    wq, wkv, wgo, gamma, beta = params
    bs, QS, H = q.shape
    KS = kv.shape[1]
    hd = n_head * head_dim
    assert hd == H, "kernel assumes hidden_dim == n_head * head_dim"

    score_bytes = jnp.dtype(score_dtype).itemsize
    vmem_cap = _vmem_capacity_bytes()
    budget = int(0.7 * vmem_cap)

    # --- block selection: VMEM-budgeted, keeps the parallel batch axis >= 2 steps ---
    if block_b is None or block_q is None:
        auto_b, auto_q = _select_blocks(bs, QS, KS, H, hd, n_head, head_dim,
                                        score_bytes, return_att_prob, budget)
        if block_b is None:
            block_b = auto_b
        if block_q is None:
            block_q = auto_q
    assert bs % block_b == 0
    assert QS % block_q == 0 and (block_q == QS or block_q % 8 == 0)
    assert block_b == 1 or (block_q % 8 == 0 and KS % 8 == 0), \
        "batch fusion needs sublane-aligned (multiple of 8) seq tiles"
    B, TQ = block_b, block_q

    footprint = _vmem_footprint(B, TQ, KS, H, hd, n_head, head_dim,
                                score_bytes, return_att_prob)
    vmem_limit = int(min(vmem_cap, max(32 << 20, int(footprint * 1.25))))

    # batch-independent graph weights, computed once (hoisted out of the kernel)
    dist = _relative_bucket_weights(QS, KS, num_buckets, max_distance)

    # bf16 weights: halves weight DMA and feeds the MXU natively; accumulation stays f32
    wq_c = wq.astype(compute_dtype)
    wkv_c = wkv.astype(compute_dtype)
    wgo_c = wgo.astype(compute_dtype)

    kernel = functools.partial(
        _graphrel_kernel, n_head=n_head, head_dim=head_dim,
        ln_eps=1e-5, mxu_dtype=compute_dtype, with_score=return_att_prob,
        approx_recip=approx_recip)

    grid = (bs // B, QS // TQ)

    in_specs = [
        pl.BlockSpec((B, TQ, H), lambda b, qi: (b, qi, 0)),          # q
        pl.BlockSpec((B, KS, H), lambda b, qi: (b, 0, 0)),           # kv
        pl.BlockSpec((B, TQ, KS), lambda b, qi: (b, qi, 0)),         # mask (int8)
        pl.BlockSpec((TQ, KS), lambda b, qi: (qi, 0)),               # dist table
        pl.BlockSpec((H, hd), lambda b, qi: (0, 0)),                 # Wq
        pl.BlockSpec((H, 2 * hd), lambda b, qi: (0, 0)),             # Wkv
        pl.BlockSpec((H, H), lambda b, qi: (0, 0)),                  # Wgo
        pl.BlockSpec((1, H), lambda b, qi: (0, 0)),                  # ln gamma
        pl.BlockSpec((1, H), lambda b, qi: (0, 0)),                  # ln beta
    ]
    out_specs = [
        pl.BlockSpec((B, TQ, H), lambda b, qi: (b, qi, 0)),          # out
        pl.BlockSpec((B, KS, 2 * hd + H), lambda b, qi: (b, 0, 0)),  # new_mem (resident)
    ]
    out_shape = [
        jax.ShapeDtypeStruct((bs, QS, H), jnp.float32),
        jax.ShapeDtypeStruct((bs, KS, 2 * hd + H), jnp.float32),
    ]
    if return_att_prob:
        out_specs.append(
            pl.BlockSpec((B, n_head, TQ, KS), lambda b, qi: (b, 0, qi, 0)))
        out_shape.append(
            jax.ShapeDtypeStruct((bs, n_head, QS, KS), score_dtype))

    scratch_shapes = [
        pltpu.VMEM((B * n_head, TQ, head_dim), compute_dtype),       # q heads
        pltpu.VMEM((B * n_head, KS, head_dim), compute_dtype),       # k heads (resident)
        pltpu.VMEM((B * n_head, KS, head_dim), compute_dtype),       # v heads (resident)
        pltpu.VMEM((B * TQ, hd), jnp.float32),                       # attended acc
    ]

    results = pl.pallas_call(
        kernel,
        grid=grid,
        in_specs=in_specs,
        out_specs=tuple(out_specs),
        out_shape=tuple(out_shape),
        scratch_shapes=scratch_shapes,
        compiler_params=pltpu.CompilerParams(
            dimension_semantics=("parallel", "arbitrary"),
            vmem_limit_bytes=vmem_limit),
    )(q, kv, mask.astype(jnp.int8), dist, wq_c, wkv_c, wgo_c, gamma, beta)

    if return_att_prob:
        out, new_mem, score_nqk = results
        if att_prob_layout == "bnqk":
            att_prob = score_nqk      # kernel layout; no extra HBM transpose pass
        else:
            att_prob = jnp.transpose(score_nqk, (0, 2, 3, 1))   # reference (b,q,k,n)
    else:
        out, new_mem = results
        att_prob = None
    return out, new_mem, att_prob


def _reference(q, kv, mask, params, *, n_head, head_dim,
               num_buckets=128, max_distance=512):
    """Plain-JAX mirror of the PyTorch forward (mem=None), for verification."""
    wq, wkv, wgo, gamma, beta = params
    bs, QS, H = q.shape
    KS = kv.shape[1]
    hd = n_head * head_dim
    scale = 1.0 / head_dim ** 0.5
    hp = lax.Precision.HIGHEST
    maskb = mask.astype(bool)

    query = jnp.einsum('bqh,hd->bqd', q, wq, precision=hp)
    kv_proj = jnp.einsum('bkh,hd->bkd', kv, wkv, precision=hp)
    key, value = kv_proj[..., :hd], kv_proj[..., hd:]
    qh = query.reshape(bs, QS, n_head, head_dim)
    kh = key.reshape(bs, KS, n_head, head_dim)
    vh = value.reshape(bs, KS, n_head, head_dim)
    score = jnp.einsum('bqnd,bknd->bqkn', qh, kh, precision=hp) * scale
    score = jnp.where(maskb[..., None], -60000.0, score)
    prob = jax.nn.softmax(score, axis=2)
    attended = jnp.einsum('bqkn,bknd->bqnd', prob, vh,
                          precision=hp).reshape(bs, QS, hd)

    ctx = jnp.arange(QS)[:, None]
    mpos = jnp.arange(KS)[None, :]
    rel = jnp.abs(mpos - ctx)
    max_exact = num_buckets // 2
    is_small = rel < max_exact
    rel_large = max_exact + (
        jnp.log(jnp.maximum(rel, 1).astype(jnp.float32) / max_exact)
        / math.log(max_distance / max_exact)
        * (num_buckets - max_exact)).astype(jnp.int32)
    rel_large = jnp.minimum(rel_large, num_buckets - 1)
    buckets = jnp.where(is_small, rel, rel_large)
    dist = 1.0 / (buckets.astype(jnp.float32) + 1.0)
    dist = jnp.where(maskb, 0.0, dist[None])
    degree = dist.sum(-1, keepdims=True)
    w = dist / degree
    graph_out = jnp.einsum(
        'bqh,hd->bqd',
        jnp.einsum('bqk,bkh->bqh', w, kv, precision=hp), wgo, precision=hp)

    pre = query + attended + graph_out
    mu = pre.mean(-1, keepdims=True)
    var = ((pre - mu) ** 2).mean(-1, keepdims=True)
    out = (pre - mu) / jnp.sqrt(var + 1e-5) * gamma.reshape(-1) + beta.reshape(-1)
    new_mem = jnp.concatenate([kv_proj, kv], axis=-1)
    return out, new_mem, score


if __name__ == "__main__":
    bs, qs, ks = 2, 8, 8
    n_head, head_dim = 4, 8
    H = n_head * head_dim  # hidden_dim = 32

    key = jax.random.PRNGKey(0)
    kq, kk, k1, k2, k3 = jax.random.split(key, 5)
    q = jax.random.normal(kq, (bs, qs, H), jnp.float32) * 0.5
    kv = jax.random.normal(kk, (bs, ks, H), jnp.float32) * 0.5

    # padding-style mask: 1 (True) => key position masked out
    lens = jnp.array([ks, ks - 3])
    mask = (jnp.arange(ks)[None, None, :] >= lens[:, None, None])
    mask = jnp.broadcast_to(mask, (bs, qs, ks)).astype(jnp.int32)

    # deterministic parameter init (shapes from the module __init__, no bias)
    wq = jax.random.normal(k1, (H, n_head * head_dim), jnp.float32) / math.sqrt(H)
    wkv = jax.random.normal(k2, (H, 2 * n_head * head_dim), jnp.float32) / math.sqrt(H)
    wgo = jax.random.normal(k3, (H, H), jnp.float32) / math.sqrt(H)
    gamma = jnp.ones((1, H), jnp.float32)   # nn.LayerNorm default weight
    beta = jnp.zeros((1, H), jnp.float32)   # nn.LayerNorm default bias
    params = (wq, wkv, wgo, gamma, beta)

    out, new_mem, att_prob = graphrel_multihead_att(
        q, kv, mask, params, n_head=n_head, head_dim=head_dim,
        num_buckets=128, max_distance=512)
    jax.block_until_ready((out, new_mem, att_prob))

    ref_out, ref_mem, ref_prob = _reference(
        q, kv, mask, params, n_head=n_head, head_dim=head_dim,
        num_buckets=128, max_distance=512)

    assert out.shape == (bs, qs, H)
    assert new_mem.shape == (bs, ks, 2 * n_head * head_dim + H)
    # default att_prob layout is the kernel-native, lane-dense (b, n_head, q, k)
    assert att_prob.shape == (bs, n_head, qs, ks)
    ref_prob_bnqk = jnp.transpose(ref_prob, (0, 3, 1, 2))
    # kernel runs its matmuls in bf16 with f32 accumulation -> 2e-2 tolerance vs the
    # all-f32 HIGHEST-precision reference.
    assert jnp.allclose(out, ref_out, atol=2e-2, rtol=2e-2)
    assert jnp.allclose(new_mem, ref_mem, atol=2e-2, rtol=2e-2)
    assert jnp.allclose(att_prob, ref_prob_bnqk, atol=2e-2, rtol=2e-2)

    print("KERNEL_OK")
</pallas_src>

<mosaic_0001>
module attributes {stable_mosaic.version = 11 : i64} {
  func.func @_graphrel_kernel(%arg0: i32, %arg1: i32, %arg2: memref<1x8x32xf32, #tpu.memory_space<vmem>>, %arg3: memref<1x8x32xf32, #tpu.memory_space<vmem>>, %arg4: memref<1x8x8xi8, #tpu.memory_space<vmem>>, %arg5: memref<8x8xf32, #tpu.memory_space<vmem>>, %arg6: memref<32x32xbf16, #tpu.memory_space<vmem>>, %arg7: memref<32x64xbf16, #tpu.memory_space<vmem>>, %arg8: memref<32x32xbf16, #tpu.memory_space<vmem>>, %arg9: memref<1x32xf32, #tpu.memory_space<vmem>>, %arg10: memref<1x32xf32, #tpu.memory_space<vmem>>, %arg11: memref<1x8x32xf32, #tpu.memory_space<vmem>>, %arg12: memref<1x8x96xf32, #tpu.memory_space<vmem>>, %arg13: memref<1x4x8x8xf32, #tpu.memory_space<vmem>>, %arg14: memref<4x8x8xbf16, #tpu.memory_space<vmem>>, %arg15: memref<4x8x8xbf16, #tpu.memory_space<vmem>>, %arg16: memref<4x8x8xbf16, #tpu.memory_space<vmem>>, %arg17: memref<8x32xf32, #tpu.memory_space<vmem>>) attributes {dimension_semantics = [#tpu.dimension_semantics<parallel>, #tpu.dimension_semantics<arbitrary>], iteration_bounds = array<i64: 2, 1>, scalar_prefetch = 0 : i64, scratch_operands = 4 : i64, tpu.core_type = #tpu.core_type<tc>, window_params = [{transform_indices = @transform_0, window_bounds = array<i64: 1, 8, 32>}, {transform_indices = @transform_1, window_bounds = array<i64: 1, 8, 32>}, {transform_indices = @transform_2, window_bounds = array<i64: 1, 8, 8>}, {transform_indices = @transform_3, window_bounds = array<i64: 8, 8>}, {pipeline_mode = #tpu.pipeline_mode<synchronous>, transform_indices = @transform_4, window_bounds = array<i64: 32, 32>}, {pipeline_mode = #tpu.pipeline_mode<synchronous>, transform_indices = @transform_5, window_bounds = array<i64: 32, 64>}, {pipeline_mode = #tpu.pipeline_mode<synchronous>, transform_indices = @transform_6, window_bounds = array<i64: 32, 32>}, {pipeline_mode = #tpu.pipeline_mode<synchronous>, transform_indices = @transform_7, window_bounds = array<i64: 1, 32>}, {pipeline_mode = #tpu.pipeline_mode<synchronous>, transform_indices = @transform_8, window_bounds = array<i64: 1, 32>}, {transform_indices = @transform_9, window_bounds = array<i64: 1, 8, 32>}, {transform_indices = @transform_10, window_bounds = array<i64: 1, 8, 96>}, {transform_indices = @transform_11, window_bounds = array<i64: 1, 4, 8, 8>}]} {
    %c0 = arith.constant 0 : index
    %c0_0 = arith.constant 0 : index
    %c0_1 = arith.constant 0 : index
    %0 = vector.load %arg2[%c0, %c0_0, %c0_1] : memref<1x8x32xf32, #tpu.memory_space<vmem>>, vector<1x8x32xf32>
    %c0_2 = arith.constant 0 : index
    %c0_3 = arith.constant 0 : index
    %c0_4 = arith.constant 0 : index
    %1 = vector.load %arg3[%c0_2, %c0_3, %c0_4] : memref<1x8x32xf32, #tpu.memory_space<vmem>>, vector<1x8x32xf32>
    %c0_5 = arith.constant 0 : index
    %c0_6 = arith.constant 0 : index
    %c0_7 = arith.constant 0 : index
    %2 = vector.load %arg4[%c0_5, %c0_6, %c0_7] : memref<1x8x8xi8, #tpu.memory_space<vmem>>, vector<1x8x8xi8>
    %c0_i8 = arith.constant 0 : i8
    %3 = vector.broadcast %c0_i8 : i8 to vector<1x8x8xi8>
    %4 = arith.cmpi ne, %2, %3 : vector<1x8x8xi8>
    %c0_8 = arith.constant 0 : index
    %c0_9 = arith.constant 0 : index
    %5 = vector.load %arg5[%c0_8, %c0_9] : memref<8x8xf32, #tpu.memory_space<vmem>>, vector<8x8xf32>
    %c0_10 = arith.constant 0 : index
    %c0_11 = arith.constant 0 : index
    %6 = vector.load %arg6[%c0_10, %c0_11] : memref<32x32xbf16, #tpu.memory_space<vmem>>, vector<32x32xbf16>
    %c0_12 = arith.constant 0 : index
    %c0_13 = arith.constant 0 : index
    %7 = vector.load %arg8[%c0_12, %c0_13] : memref<32x32xbf16, #tpu.memory_space<vmem>>, vector<32x32xbf16>
    %8 = arith.truncf %1 : vector<1x8x32xf32> to vector<1x8x32xbf16>
    %9 = vector.shape_cast %0 : vector<1x8x32xf32> to vector<8x32xf32>
    %10 = arith.truncf %9 : vector<8x32xf32> to vector<8x32xbf16>
    %cst = arith.constant dense<0.000000e+00> : vector<8x32xf32>
    %11 = tpu.matmul %10, %6, %cst {dimension_numbers = #tpu.dot_dimension_numbers<[1], [0], [0], [1], [0, 0, 1, 1], [], []>} : vector<8x32xbf16>, vector<32x32xbf16>, vector<8x32xf32> -> vector<8x32xf32>
    %12 = arith.truncf %11 : vector<8x32xf32> to vector<8x32xbf16>
    %c0_i32 = arith.constant 0 : i32
    %13 = arith.cmpi eq, %arg1, %c0_i32 : i32
    %14 = arith.extui %13 : i1 to i32
    %c0_i32_14 = arith.constant 0 : i32
    %15 = arith.cmpi ne, %14, %c0_i32_14 : i32
    scf.if %15 {
      %116 = vector.shape_cast %8 : vector<1x8x32xbf16> to vector<8x32xbf16>
      %c0_66 = arith.constant 0 : index
      %c0_67 = arith.constant 0 : index
      %117 = vector.load %arg7[%c0_66, %c0_67] : memref<32x64xbf16, #tpu.memory_space<vmem>>, vector<32x64xbf16>
      %cst_68 = arith.constant dense<0.000000e+00> : vector<8x64xf32>
      %118 = tpu.matmul %116, %117, %cst_68 {dimension_numbers = #tpu.dot_dimension_numbers<[1], [0], [0], [1], [0, 0, 1, 1], [], []>} : vector<8x32xbf16>, vector<32x64xbf16>, vector<8x64xf32> -> vector<8x64xf32>
      %119 = vector.shape_cast %118 : vector<8x64xf32> to vector<1x8x64xf32>
      %c0_69 = arith.constant 0 : index
      %c0_70 = arith.constant 0 : index
      %c0_71 = arith.constant 0 : index
      %120 = vector.load %arg12[%c0_69, %c0_70, %c0_71] : memref<1x8x96xf32, #tpu.memory_space<vmem>>, vector<1x8x64xf32>
      tpu.vector_store %arg12[%c0_69, %c0_70, %c0_71], %119 {strides = array<i32>} : memref<1x8x96xf32, #tpu.memory_space<vmem>>, vector<1x8x64xf32>,
      %c0_72 = arith.constant 0 : index
      %c0_73 = arith.constant 0 : index
      %c64 = arith.constant 64 : index
      %121 = vector.load %arg12[%c0_72, %c0_73, %c64] : memref<1x8x96xf32, #tpu.memory_space<vmem>>, vector<1x8x32xf32>
      tpu.vector_store %arg12[%c0_72, %c0_73, %c64], %1 {strides = array<i32>} : memref<1x8x96xf32, #tpu.memory_space<vmem>>, vector<1x8x32xf32>,
      %122 = arith.truncf %118 : vector<8x64xf32> to vector<8x64xbf16>
      %123 = vector.extract_strided_slice %122 {offsets = [0, 0], sizes = [8, 8], strides = [1, 1]} : vector<8x64xbf16> to vector<8x8xbf16>
      %c0_74 = arith.constant 0 : index
      %c0_75 = arith.constant 0 : index
      %c0_76 = arith.constant 0 : index
      %124 = vector.load %arg15[%c0_74, %c0_75, %c0_76] : memref<4x8x8xbf16, #tpu.memory_space<vmem>>, vector<1x8x8xbf16>
      %125 = vector.shape_cast %124 : vector<1x8x8xbf16> to vector<8x8xbf16>
      %126 = vector.shape_cast %123 : vector<8x8xbf16> to vector<1x8x8xbf16>
      tpu.vector_store %arg15[%c0_74, %c0_75, %c0_76], %126 {strides = array<i32>} : memref<4x8x8xbf16, #tpu.memory_space<vmem>>, vector<1x8x8xbf16>,
      %127 = vector.extract_strided_slice %122 {offsets = [0, 32], sizes = [8, 8], strides = [1, 1]} : vector<8x64xbf16> to vector<8x8xbf16>
      %c0_77 = arith.constant 0 : index
      %c0_78 = arith.constant 0 : index
      %c0_79 = arith.constant 0 : index
      %128 = vector.load %arg16[%c0_77, %c0_78, %c0_79] : memref<4x8x8xbf16, #tpu.memory_space<vmem>>, vector<1x8x8xbf16>
      %129 = vector.shape_cast %128 : vector<1x8x8xbf16> to vector<8x8xbf16>
      %130 = vector.shape_cast %127 : vector<8x8xbf16> to vector<1x8x8xbf16>
      tpu.vector_store %arg16[%c0_77, %c0_78, %c0_79], %130 {strides = array<i32>} : memref<4x8x8xbf16, #tpu.memory_space<vmem>>, vector<1x8x8xbf16>,
      %131 = vector.extract_strided_slice %122 {offsets = [0, 8], sizes = [8, 8], strides = [1, 1]} : vector<8x64xbf16> to vector<8x8xbf16>
      %c1_80 = arith.constant 1 : index
      %c0_81 = arith.constant 0 : index
      %c0_82 = arith.constant 0 : index
      %132 = vector.load %arg15[%c1_80, %c0_81, %c0_82] : memref<4x8x8xbf16, #tpu.memory_space<vmem>>, vector<1x8x8xbf16>
      %133 = vector.shape_cast %132 : vector<1x8x8xbf16> to vector<8x8xbf16>
      %134 = vector.shape_cast %131 : vector<8x8xbf16> to vector<1x8x8xbf16>
      tpu.vector_store %arg15[%c1_80, %c0_81, %c0_82], %134 {strides = array<i32>} : memref<4x8x8xbf16, #tpu.memory_space<vmem>>, vector<1x8x8xbf16>,
      %135 = vector.extract_strided_slice %122 {offsets = [0, 40], sizes = [8, 8], strides = [1, 1]} : vector<8x64xbf16> to vector<8x8xbf16>
      %c1_83 = arith.constant 1 : index
      %c0_84 = arith.constant 0 : index
      %c0_85 = arith.constant 0 : index
      %136 = vector.load %arg16[%c1_83, %c0_84, %c0_85] : memref<4x8x8xbf16, #tpu.memory_space<vmem>>, vector<1x8x8xbf16>
      %137 = vector.shape_cast %136 : vector<1x8x8xbf16> to vector<8x8xbf16>
      %138 = vector.shape_cast %135 : vector<8x8xbf16> to vector<1x8x8xbf16>
      tpu.vector_store %arg16[%c1_83, %c0_84, %c0_85], %138 {strides = array<i32>} : memref<4x8x8xbf16, #tpu.memory_space<vmem>>, vector<1x8x8xbf16>,
      %139 = vector.extract_strided_slice %122 {offsets = [0, 16], sizes = [8, 8], strides = [1, 1]} : vector<8x64xbf16> to vector<8x8xbf16>
      %c2_86 = arith.constant 2 : index
      %c0_87 = arith.constant 0 : index
      %c0_88 = arith.constant 0 : index
      %140 = vector.load %arg15[%c2_86, %c0_87, %c0_88] : memref<4x8x8xbf16, #tpu.memory_space<vmem>>, vector<1x8x8xbf16>
      %141 = vector.shape_cast %140 : vector<1x8x8xbf16> to vector<8x8xbf16>
      %142 = vector.shape_cast %139 : vector<8x8xbf16> to vector<1x8x8xbf16>
      tpu.vector_store %arg15[%c2_86, %c0_87, %c0_88], %142 {strides = array<i32>} : memref<4x8x8xbf16, #tpu.memory_space<vmem>>, vector<1x8x8xbf16>,
      %143 = vector.extract_strided_slice %122 {offsets = [0, 48], sizes = [8, 8], strides = [1, 1]} : vector<8x64xbf16> to vector<8x8xbf16>
      %c2_89 = arith.constant 2 : index
      %c0_90 = arith.constant 0 : index
      %c0_91 = arith.constant 0 : index
      %144 = vector.load %arg16[%c2_89, %c0_90, %c0_91] : memref<4x8x8xbf16, #tpu.memory_space<vmem>>, vector<1x8x8xbf16>
      %145 = vector.shape_cast %144 : vector<1x8x8xbf16> to vector<8x8xbf16>
      %146 = vector.shape_cast %143 : vector<8x8xbf16> to vector<1x8x8xbf16>
      tpu.vector_store %arg16[%c2_89, %c0_90, %c0_91], %146 {strides = array<i32>} : memref<4x8x8xbf16, #tpu.memory_space<vmem>>, vector<1x8x8xbf16>,
      %147 = vector.extract_strided_slice %122 {offsets = [0, 24], sizes = [8, 8], strides = [1, 1]} : vector<8x64xbf16> to vector<8x8xbf16>
      %c3_92 = arith.constant 3 : index
      %c0_93 = arith.constant 0 : index
      %c0_94 = arith.constant 0 : index
      %148 = vector.load %arg15[%c3_92, %c0_93, %c0_94] : memref<4x8x8xbf16, #tpu.memory_space<vmem>>, vector<1x8x8xbf16>
      %149 = vector.shape_cast %148 : vector<1x8x8xbf16> to vector<8x8xbf16>
      %150 = vector.shape_cast %147 : vector<8x8xbf16> to vector<1x8x8xbf16>
      tpu.vector_store %arg15[%c3_92, %c0_93, %c0_94], %150 {strides = array<i32>} : memref<4x8x8xbf16, #tpu.memory_space<vmem>>, vector<1x8x8xbf16>,
      %151 = vector.extract_strided_slice %122 {offsets = [0, 56], sizes = [8, 8], strides = [1, 1]} : vector<8x64xbf16> to vector<8x8xbf16>
      %c3_95 = arith.constant 3 : index
      %c0_96 = arith.constant 0 : index
      %c0_97 = arith.constant 0 : index
      %152 = vector.load %arg16[%c3_95, %c0_96, %c0_97] : memref<4x8x8xbf16, #tpu.memory_space<vmem>>, vector<1x8x8xbf16>
      %153 = vector.shape_cast %152 : vector<1x8x8xbf16> to vector<8x8xbf16>
      %154 = vector.shape_cast %151 : vector<8x8xbf16> to vector<1x8x8xbf16>
      tpu.vector_store %arg16[%c3_95, %c0_96, %c0_97], %154 {strides = array<i32>} : memref<4x8x8xbf16, #tpu.memory_space<vmem>>, vector<1x8x8xbf16>,
    } else {
    }
    %16 = vector.extract_strided_slice %12 {offsets = [0, 0], sizes = [8, 8], strides = [1, 1]} : vector<8x32xbf16> to vector<8x8xbf16>
    %c0_15 = arith.constant 0 : index
    %c0_16 = arith.constant 0 : index
    %c0_17 = arith.constant 0 : index
    %17 = vector.load %arg14[%c0_15, %c0_16, %c0_17] : memref<4x8x8xbf16, #tpu.memory_space<vmem>>, vector<1x8x8xbf16>
    %18 = vector.shape_cast %17 : vector<1x8x8xbf16> to vector<8x8xbf16>
    %19 = vector.shape_cast %16 : vector<8x8xbf16> to vector<1x8x8xbf16>
    tpu.vector_store %arg14[%c0_15, %c0_16, %c0_17], %19 {strides = array<i32>} : memref<4x8x8xbf16, #tpu.memory_space<vmem>>, vector<1x8x8xbf16>,
    %20 = vector.extract_strided_slice %12 {offsets = [0, 8], sizes = [8, 8], strides = [1, 1]} : vector<8x32xbf16> to vector<8x8xbf16>
    %c1 = arith.constant 1 : index
    %c0_18 = arith.constant 0 : index
    %c0_19 = arith.constant 0 : index
    %21 = vector.load %arg14[%c1, %c0_18, %c0_19] : memref<4x8x8xbf16, #tpu.memory_space<vmem>>, vector<1x8x8xbf16>
    %22 = vector.shape_cast %21 : vector<1x8x8xbf16> to vector<8x8xbf16>
    %23 = vector.shape_cast %20 : vector<8x8xbf16> to vector<1x8x8xbf16>
    tpu.vector_store %arg14[%c1, %c0_18, %c0_19], %23 {strides = array<i32>} : memref<4x8x8xbf16, #tpu.memory_space<vmem>>, vector<1x8x8xbf16>,
    %24 = vector.extract_strided_slice %12 {offsets = [0, 16], sizes = [8, 8], strides = [1, 1]} : vector<8x32xbf16> to vector<8x8xbf16>
    %c2 = arith.constant 2 : index
    %c0_20 = arith.constant 0 : index
    %c0_21 = arith.constant 0 : index
    %25 = vector.load %arg14[%c2, %c0_20, %c0_21] : memref<4x8x8xbf16, #tpu.memory_space<vmem>>, vector<1x8x8xbf16>
    %26 = vector.shape_cast %25 : vector<1x8x8xbf16> to vector<8x8xbf16>
    %27 = vector.shape_cast %24 : vector<8x8xbf16> to vector<1x8x8xbf16>
    tpu.vector_store %arg14[%c2, %c0_20, %c0_21], %27 {strides = array<i32>} : memref<4x8x8xbf16, #tpu.memory_space<vmem>>, vector<1x8x8xbf16>,
    %28 = vector.extract_strided_slice %12 {offsets = [0, 24], sizes = [8, 8], strides = [1, 1]} : vector<8x32xbf16> to vector<8x8xbf16>
    %c3 = arith.constant 3 : index
    %c0_22 = arith.constant 0 : index
    %c0_23 = arith.constant 0 : index
    %29 = vector.load %arg14[%c3, %c0_22, %c0_23] : memref<4x8x8xbf16, #tpu.memory_space<vmem>>, vector<1x8x8xbf16>
    %30 = vector.shape_cast %29 : vector<1x8x8xbf16> to vector<8x8xbf16>
    %31 = vector.shape_cast %28 : vector<8x8xbf16> to vector<1x8x8xbf16>
    tpu.vector_store %arg14[%c3, %c0_22, %c0_23], %31 {strides = array<i32>} : memref<4x8x8xbf16, #tpu.memory_space<vmem>>, vector<1x8x8xbf16>,
    %c0_24 = arith.constant 0 : index
    %c0_25 = arith.constant 0 : index
    %c0_26 = arith.constant 0 : index
    %32 = vector.load %arg14[%c0_24, %c0_25, %c0_26] : memref<4x8x8xbf16, #tpu.memory_space<vmem>>, vector<4x8x8xbf16>
    %c0_27 = arith.constant 0 : index
    %c0_28 = arith.constant 0 : index
    %c0_29 = arith.constant 0 : index
    %33 = vector.load %arg15[%c0_27, %c0_28, %c0_29] : memref<4x8x8xbf16, #tpu.memory_space<vmem>>, vector<4x8x8xbf16>
    "tpu.trace_start"() <{level = 10 : i32, message = "nqd,nkd->nqk"}> : () -> ()
    %cst_30 = arith.constant dense<0.000000e+00> : vector<4x8x8xf32>
    %34 = tpu.matmul %32, %33, %cst_30 {dimension_numbers = #tpu.dot_dimension_numbers<[2], [2], [1], [1], [0, 0, 0, 1, 1, 1], [0], [0]>} : vector<4x8x8xbf16>, vector<4x8x8xbf16>, vector<4x8x8xf32> -> vector<4x8x8xf32>
    "tpu.trace_stop"() : () -> ()
    %cst_31 = arith.constant 0.353553385 : f32
    %35 = vector.broadcast %cst_31 : f32 to vector<4x8x8xf32>
    %36 = arith.mulf %34, %35 : vector<4x8x8xf32>
    %37 = vector.shape_cast %36 : vector<4x8x8xf32> to vector<1x4x8x8xf32>
    %38 = vector.shape_cast %4 : vector<1x8x8xi1> to vector<1x1x8x8xi1>
    %39 = vector.shape_cast %38 : vector<1x1x8x8xi1> to vector<1x1x8x8xi1>
    %40 = vector.broadcast %39 : vector<1x1x8x8xi1> to vector<1x4x8x8xi1>
    %cst_32 = arith.constant -6.000000e+04 : f32
    %41 = vector.broadcast %cst_32 : f32 to vector<1x4x8x8xf32>
    %42 = arith.select %40, %41, %37 : vector<1x4x8x8xi1>, vector<1x4x8x8xf32>
    %c0_33 = arith.constant 0 : index
    %c0_34 = arith.constant 0 : index
    %c0_35 = arith.constant 0 : index
    %c0_36 = arith.constant 0 : index
    %43 = vector.load %arg13[%c0_33, %c0_34, %c0_35, %c0_36] : memref<1x4x8x8xf32, #tpu.memory_space<vmem>>, vector<1x4x8x8xf32>
    tpu.vector_store %arg13[%c0_33, %c0_34, %c0_35, %c0_36], %42 {strides = array<i32>} : memref<1x4x8x8xf32, #tpu.memory_space<vmem>>, vector<1x4x8x8xf32>,
    %cst_37 = arith.constant dense<0xFF800000> : vector<1x4x8xf32>
    %44 = vector.multi_reduction <maximumf>, %42, %cst_37 [3] : vector<1x4x8x8xf32> to vector<1x4x8xf32>
    %45 = vector.shape_cast %44 : vector<1x4x8xf32> to vector<1x4x8x1xf32>
    %46 = vector.broadcast %45 : vector<1x4x8x1xf32> to vector<1x4x8x8xf32>
    %47 = arith.subf %42, %46 : vector<1x4x8x8xf32>
    %48 = math.exp %47 : vector<1x4x8x8xf32>
    %cst_38 = arith.constant dense<0.000000e+00> : vector<1x4x8xf32>
    %49 = vector.multi_reduction <add>, %48, %cst_38 [3] : vector<1x4x8x8xf32> to vector<1x4x8xf32>
    %50 = vector.shape_cast %49 : vector<1x4x8xf32> to vector<1x4x8x1xf32>
    %51 = tpu.reciprocal %50 {approx = true} : vector<1x4x8x1xf32> -> vector<1x4x8x1xf32>
    %52 = vector.broadcast %51 : vector<1x4x8x1xf32> to vector<1x4x8x8xf32>
    %53 = arith.mulf %48, %52 : vector<1x4x8x8xf32>
    %54 = vector.shape_cast %53 : vector<1x4x8x8xf32> to vector<4x8x8xf32>
    %55 = arith.truncf %54 : vector<4x8x8xf32> to vector<4x8x8xbf16>
    %c0_39 = arith.constant 0 : index
    %c0_40 = arith.constant 0 : index
    %c0_41 = arith.constant 0 : index
    %56 = vector.load %arg16[%c0_39, %c0_40, %c0_41] : memref<4x8x8xbf16, #tpu.memory_space<vmem>>, vector<4x8x8xbf16>
    "tpu.trace_start"() <{level = 10 : i32, message = "nqk,nkd->nqd"}> : () -> ()
    %cst_42 = arith.constant dense<0.000000e+00> : vector<4x8x8xf32>
    %57 = tpu.matmul %55, %56, %cst_42 {dimension_numbers = #tpu.dot_dimension_numbers<[2], [1], [1], [2], [0, 0, 0, 1, 1, 2], [0], [0]>} : vector<4x8x8xbf16>, vector<4x8x8xbf16>, vector<4x8x8xf32> -> vector<4x8x8xf32>
    "tpu.trace_stop"() : () -> ()
    %58 = vector.extract_strided_slice %57 {offsets = [0, 0, 0], sizes = [1, 8, 8], strides = [1, 1, 1]} : vector<4x8x8xf32> to vector<1x8x8xf32>
    %59 = vector.shape_cast %58 : vector<1x8x8xf32> to vector<8x8xf32>
    %c0_43 = arith.constant 0 : index
    %c0_44 = arith.constant 0 : index
    %60 = vector.load %arg17[%c0_43, %c0_44] : memref<8x32xf32, #tpu.memory_space<vmem>>, vector<8x8xf32>
    tpu.vector_store %arg17[%c0_43, %c0_44], %59 {strides = array<i32>} : memref<8x32xf32, #tpu.memory_space<vmem>>, vector<8x8xf32>,
    %61 = vector.extract_strided_slice %57 {offsets = [1, 0, 0], sizes = [1, 8, 8], strides = [1, 1, 1]} : vector<4x8x8xf32> to vector<1x8x8xf32>
    %62 = vector.shape_cast %61 : vector<1x8x8xf32> to vector<8x8xf32>
    %c0_45 = arith.constant 0 : index
    %c8 = arith.constant 8 : index
    %63 = vector.load %arg17[%c0_45, %c8] : memref<8x32xf32, #tpu.memory_space<vmem>>, vector<8x8xf32>
    tpu.vector_store %arg17[%c0_45, %c8], %62 {strides = array<i32>} : memref<8x32xf32, #tpu.memory_space<vmem>>, vector<8x8xf32>,
    %64 = vector.extract_strided_slice %57 {offsets = [2, 0, 0], sizes = [1, 8, 8], strides = [1, 1, 1]} : vector<4x8x8xf32> to vector<1x8x8xf32>
    %65 = vector.shape_cast %64 : vector<1x8x8xf32> to vector<8x8xf32>
    %c0_46 = arith.constant 0 : index
    %c16 = arith.constant 16 : index
    %66 = vector.load %arg17[%c0_46, %c16] : memref<8x32xf32, #tpu.memory_space<vmem>>, vector<8x8xf32>
    tpu.vector_store %arg17[%c0_46, %c16], %65 {strides = array<i32>} : memref<8x32xf32, #tpu.memory_space<vmem>>, vector<8x8xf32>,
    %67 = vector.extract_strided_slice %57 {offsets = [3, 0, 0], sizes = [1, 8, 8], strides = [1, 1, 1]} : vector<4x8x8xf32> to vector<1x8x8xf32>
    %68 = vector.shape_cast %67 : vector<1x8x8xf32> to vector<8x8xf32>
    %c0_47 = arith.constant 0 : index
    %c24 = arith.constant 24 : index
    %69 = vector.load %arg17[%c0_47, %c24] : memref<8x32xf32, #tpu.memory_space<vmem>>, vector<8x8xf32>
    tpu.vector_store %arg17[%c0_47, %c24], %68 {strides = array<i32>} : memref<8x32xf32, #tpu.memory_space<vmem>>, vector<8x8xf32>,
    %70 = vector.shape_cast %5 : vector<8x8xf32> to vector<1x8x8xf32>
    %cst_48 = arith.constant 0.000000e+00 : f32
    %71 = vector.broadcast %cst_48 : f32 to vector<1x8x8xf32>
    %72 = arith.select %4, %71, %70 : vector<1x8x8xi1>, vector<1x8x8xf32>
    %cst_49 = arith.constant dense<0.000000e+00> : vector<1x8xf32>
    %73 = vector.multi_reduction <add>, %72, %cst_49 [2] : vector<1x8x8xf32> to vector<1x8xf32>
    %74 = vector.shape_cast %73 : vector<1x8xf32> to vector<1x8x1xf32>
    %75 = tpu.reciprocal %74 {approx = true} : vector<1x8x1xf32> -> vector<1x8x1xf32>
    %76 = vector.broadcast %75 : vector<1x8x1xf32> to vector<1x8x8xf32>
    %77 = arith.mulf %72, %76 : vector<1x8x8xf32>
    %78 = arith.truncf %77 : vector<1x8x8xf32> to vector<1x8x8xbf16>
    "tpu.trace_start"() <{level = 10 : i32, message = "bqk,bkh->bqh"}> : () -> ()
    %cst_50 = arith.constant dense<0.000000e+00> : vector<1x8x32xf32>
    %79 = tpu.matmul %78, %8, %cst_50 {dimension_numbers = #tpu.dot_dimension_numbers<[2], [1], [1], [2], [0, 0, 0, 1, 1, 2], [0], [0]>} : vector<1x8x8xbf16>, vector<1x8x32xbf16>, vector<1x8x32xf32> -> vector<1x8x32xf32>
    "tpu.trace_stop"() : () -> ()
    %80 = vector.shape_cast %79 : vector<1x8x32xf32> to vector<8x32xf32>
    %81 = arith.truncf %80 : vector<8x32xf32> to vector<8x32xbf16>
    %cst_51 = arith.constant dense<0.000000e+00> : vector<8x32xf32>
    %82 = tpu.matmul %81, %7, %cst_51 {dimension_numbers = #tpu.dot_dimension_numbers<[1], [0], [0], [1], [0, 0, 1, 1], [], []>} : vector<8x32xbf16>, vector<32x32xbf16>, vector<8x32xf32> -> vector<8x32xf32>
    %c0_52 = arith.constant 0 : index
    %c0_53 = arith.constant 0 : index
    %83 = vector.load %arg17[%c0_52, %c0_53] : memref<8x32xf32, #tpu.memory_space<vmem>>, vector<8x32xf32>
    %84 = arith.addf %11, %83 : vector<8x32xf32>
    %85 = arith.addf %84, %82 : vector<8x32xf32>
    %cst_54 = arith.constant dense<0.000000e+00> : vector<8xf32>
    %86 = vector.multi_reduction <add>, %85, %cst_54 [1] : vector<8x32xf32> to vector<8xf32>
    %87 = vector.shape_cast %86 : vector<8xf32> to vector<8x1xf32>
    %cst_55 = arith.constant 3.200000e+01 : f32
    %88 = vector.broadcast %cst_55 : f32 to vector<8x1xf32>
    %89 = arith.divf %87, %88 : vector<8x1xf32>
    %90 = vector.broadcast %89 : vector<8x1xf32> to vector<8x32xf32>
    %91 = arith.subf %85, %90 : vector<8x32xf32>
    %92 = arith.mulf %91, %91 : vector<8x32xf32>
    %cst_56 = arith.constant dense<0.000000e+00> : vector<8xf32>
    %93 = vector.multi_reduction <add>, %92, %cst_56 [1] : vector<8x32xf32> to vector<8xf32>
    %94 = vector.shape_cast %93 : vector<8xf32> to vector<8x1xf32>
    %cst_57 = arith.constant 3.200000e+01 : f32
    %95 = vector.broadcast %cst_57 : f32 to vector<8x1xf32>
    %96 = arith.divf %94, %95 : vector<8x1xf32>
    %97 = vector.broadcast %89 : vector<8x1xf32> to vector<8x32xf32>
    %98 = arith.subf %85, %97 : vector<8x32xf32>
    %cst_58 = arith.constant 9.99999974E-6 : f32
    %99 = vector.broadcast %cst_58 : f32 to vector<8x1xf32>
    %100 = arith.addf %96, %99 : vector<8x1xf32>
    %101 = math.rsqrt %100 : vector<8x1xf32>
    %102 = vector.broadcast %101 : vector<8x1xf32> to vector<8x32xf32>
    %103 = arith.mulf %98, %102 : vector<8x32xf32>
    %c0_59 = arith.constant 0 : index
    %c0_60 = arith.constant 0 : index
    %104 = vector.load %arg9[%c0_59, %c0_60] : memref<1x32xf32, #tpu.memory_space<vmem>>, vector<1x32xf32>
    %105 = vector.shape_cast %104 : vector<1x32xf32> to vector<32xf32>
    %106 = vector.shape_cast %105 : vector<32xf32> to vector<1x32xf32>
    %107 = vector.broadcast %106 : vector<1x32xf32> to vector<8x32xf32>
    %108 = arith.mulf %103, %107 : vector<8x32xf32>
    %c0_61 = arith.constant 0 : index
    %c0_62 = arith.constant 0 : index
    %109 = vector.load %arg10[%c0_61, %c0_62] : memref<1x32xf32, #tpu.memory_space<vmem>>, vector<1x32xf32>
    %110 = vector.shape_cast %109 : vector<1x32xf32> to vector<32xf32>
    %111 = vector.shape_cast %110 : vector<32xf32> to vector<1x32xf32>
    %112 = vector.broadcast %111 : vector<1x32xf32> to vector<8x32xf32>
    %113 = arith.addf %108, %112 : vector<8x32xf32>
    %114 = vector.shape_cast %113 : vector<8x32xf32> to vector<1x8x32xf32>
    %c0_63 = arith.constant 0 : index
    %c0_64 = arith.constant 0 : index
    %c0_65 = arith.constant 0 : index
    %115 = vector.load %arg11[%c0_63, %c0_64, %c0_65] : memref<1x8x32xf32, #tpu.memory_space<vmem>>, vector<1x8x32xf32>
    tpu.vector_store %arg11[%c0_63, %c0_64, %c0_65], %114 {strides = array<i32>} : memref<1x8x32xf32, #tpu.memory_space<vmem>>, vector<1x8x32xf32>,
    return
  }
  func.func @transform_0(%arg0: i32, %arg1: i32) -> (i32, i32, i32) {
    %c0_i32 = arith.constant 0 : i32
    %c0_i32_0 = arith.constant 0 : i32
    return %arg0, %arg1, %c0_i32 : i32, i32, i32
  }
  func.func @transform_1(%arg0: i32, %arg1: i32) -> (i32, i32, i32) {
    %c0_i32 = arith.constant 0 : i32
    %c0_i32_0 = arith.constant 0 : i32
    %c0_i32_1 = arith.constant 0 : i32
    return %arg0, %c0_i32, %c0_i32_0 : i32, i32, i32
  }
  func.func @transform_2(%arg0: i32, %arg1: i32) -> (i32, i32, i32) {
    %c0_i32 = arith.constant 0 : i32
    %c0_i32_0 = arith.constant 0 : i32
    return %arg0, %arg1, %c0_i32 : i32, i32, i32
  }
  func.func @transform_3(%arg0: i32, %arg1: i32) -> (i32, i32) {
    %c0_i32 = arith.constant 0 : i32
    %c0_i32_0 = arith.constant 0 : i32
    return %arg1, %c0_i32 : i32, i32
  }
  func.func @transform_4(%arg0: i32, %arg1: i32) -> (i32, i32) {
    %c0_i32 = arith.constant 0 : i32
    %c0_i32_0 = arith.constant 0 : i32
    %c0_i32_1 = arith.constant 0 : i32
    return %c0_i32, %c0_i32_0 : i32, i32
  }
  func.func @transform_5(%arg0: i32, %arg1: i32) -> (i32, i32) {
    %c0_i32 = arith.constant 0 : i32
    %c0_i32_0 = arith.constant 0 : i32
    %c0_i32_1 = arith.constant 0 : i32
    return %c0_i32, %c0_i32_0 : i32, i32
  }
  func.func @transform_6(%arg0: i32, %arg1: i32) -> (i32, i32) {
    %c0_i32 = arith.constant 0 : i32
    %c0_i32_0 = arith.constant 0 : i32
    %c0_i32_1 = arith.constant 0 : i32
    return %c0_i32, %c0_i32_0 : i32, i32
  }
  func.func @transform_7(%arg0: i32, %arg1: i32) -> (i32, i32) {
    %c0_i32 = arith.constant 0 : i32
    %c0_i32_0 = arith.constant 0 : i32
    %c0_i32_1 = arith.constant 0 : i32
    return %c0_i32, %c0_i32_0 : i32, i32
  }
  func.func @transform_8(%arg0: i32, %arg1: i32) -> (i32, i32) {
    %c0_i32 = arith.constant 0 : i32
    %c0_i32_0 = arith.constant 0 : i32
    %c0_i32_1 = arith.constant 0 : i32
    return %c0_i32, %c0_i32_0 : i32, i32
  }
  func.func @transform_9(%arg0: i32, %arg1: i32) -> (i32, i32, i32) {
    %c0_i32 = arith.constant 0 : i32
    %c0_i32_0 = arith.constant 0 : i32
    return %arg0, %arg1, %c0_i32 : i32, i32, i32
  }
  func.func @transform_10(%arg0: i32, %arg1: i32) -> (i32, i32, i32) {
    %c0_i32 = arith.constant 0 : i32
    %c0_i32_0 = arith.constant 0 : i32
    %c0_i32_1 = arith.constant 0 : i32
    return %arg0, %c0_i32, %c0_i32_0 : i32, i32, i32
  }
  func.func @transform_11(%arg0: i32, %arg1: i32) -> (i32, i32, i32, i32) {
    %c0_i32 = arith.constant 0 : i32
    %c0_i32_0 = arith.constant 0 : i32
    %c0_i32_1 = arith.constant 0 : i32
    return %arg0, %c0_i32, %arg1, %c0_i32_0 : i32, i32, i32, i32
  }
}

</mosaic_0001>

<llo_original>
// kernel: tpu_custom_call.1
$region0: #{tpu_custom_call.1}
  #allocation0 [shape = 'u32[]', space=smem, size = 0x4, offset = 0x4, fixed_abs, tag = 'smem constant byte address 0x4 - core index']
  #allocation1 [shape = 'u32[144,128]{1,0:T(1,128)}', space=vmem, size = 0x12000, scoped, tag = 'internal scratch']
  #allocation2 [shape = 'bf16[4,8,8]{2,1,0:T(8,128)(2,1)}', space=vmem, size = 0x2000, scoped, tag = 'scratch operand']
  #allocation3 [shape = 'bf16[4,8,8]{2,1,0:T(8,128)(2,1)}', space=vmem, size = 0x2000, scoped, tag = 'scratch operand']
  #allocation4 [shape = 'bf16[4,8,8]{2,1,0:T(8,128)(2,1)}', space=vmem, size = 0x2000, scoped, tag = 'scratch operand']
  #allocation5 [shape = 'f32[8,32]{1,0:T(8,128)}', space=vmem, size = 0x1000, scoped, tag = 'scratch operand']
  %s0 = inlined_call_operand.hbm [shape: f32[2,8,32], index: 0, kind: input, shape index: {}]
  %s1 = inlined_call_operand.hbm [shape: f32[2,8,32], index: 1, kind: input, shape index: {}]
  %s2 = inlined_call_operand.hbm [shape: s8[2,8,8], index: 2, kind: input, shape index: {}]
  %s3 = inlined_call_operand.hbm [shape: f32[8,8], index: 3, kind: input, shape index: {}]
  %s4 = inlined_call_operand.hbm [shape: bf16[32,32], index: 4, kind: input, shape index: {}]
  %s5 = inlined_call_operand.hbm [shape: bf16[32,64], index: 5, kind: input, shape index: {}]
  %s6 = inlined_call_operand.hbm [shape: bf16[32,32], index: 6, kind: input, shape index: {}]
  %s7 = inlined_call_operand.vmem [shape: f32[1,32], index: 7, kind: input, shape index: {}]
  %s8 = inlined_call_operand.vmem [shape: f32[1,32], index: 8, kind: input, shape index: {}]
  %s9 = inlined_call_operand.hbm [shape: f32[2,8,32], index: 9, kind: output, shape index: {0}]
  %s10 = inlined_call_operand.hbm [shape: f32[2,8,96], index: 10, kind: output, shape index: {1}]
  %s11 = inlined_call_operand.hbm [shape: f32[2,4,8,8], index: 11, kind: output, shape index: {2}]
  %12 = xla_tuple %s9, %s10, %s11
  %s13 = sld [smem:[#allocation0]]
  $region117: #{tpu_custom_call.1} parent=0
    _
  %s15 = ssub.s32 1, %s13
  %s16 = scalar_select 0, %s15, %s13
  $region1: #{tpu_custom_call.1} parent=0
    #allocation6 [shape = 'u8[8192]{0}', space=vmem, size = 0x2000, scoped, tag = 'input window, operand 0']
    #allocation7 [shape = 's32[2]{0}', space=sflag, size = 0x8, scoped, tag = 'scoped memory for tpu_custom_call.1']
    #allocation8 [shape = 's32[2]{0}', space=sflag, size = 0x8, scoped, tag = 'scoped memory for tpu_custom_call.1']
    #allocation9 [shape = 'u8[8192]{0}', space=vmem, size = 0x2000, scoped, tag = 'input window, operand 1']
    #allocation10 [shape = 's32[2]{0}', space=sflag, size = 0x8, scoped, tag = 'scoped memory for tpu_custom_call.1']
    #allocation11 [shape = 'u8[2048]{0}', space=vmem, size = 0x800, scoped, tag = 'input window, operand 2']
    #allocation12 [shape = 'u8[4096]{0}', space=vmem, size = 0x1000, scoped, tag = 'input window, operand 3, single buffered']
    #allocation13 [shape = 's32[1]{0}', space=sflag, size = 0x4, scoped, tag = 'scoped memory for tpu_custom_call.1']
    #allocation14 [shape = 'u8[8192]{0}', space=vmem, size = 0x2000, scoped, tag = 'input window, operand 4, single buffered']
    #allocation15 [shape = 'u8[8192]{0}', space=vmem, size = 0x2000, scoped, tag = 'input window, operand 5, single buffered']
    #allocation16 [shape = 's32[1]{0}', space=sflag, size = 0x4, scoped, tag = 'scoped memory for tpu_custom_call.1']
    #allocation17 [shape = 'u8[8192]{0}', space=vmem, size = 0x2000, scoped, tag = 'input window, operand 6, single buffered']
    #allocation18 [shape = 'u8[8192]{0}', space=vmem, size = 0x2000, scoped, tag = 'output window, operand 0']
    #allocation19 [shape = 'u8[8192]{0}', space=vmem, size = 0x2000, scoped, tag = 'output window, operand 1']
    #allocation20 [shape = 's32[2]{0}', space=sflag, size = 0x8, scoped, tag = 'scoped memory for tpu_custom_call.1']
    #allocation21 [shape = 'u8[32768]{0}', space=vmem, size = 0x8000, scoped, tag = 'output window, operand 2']
    %17 = vsyncpa [#allocation7], 0
    %s18 = scalar_lea.sflag [#allocation7], 1
    %19 = vsyncpa %s18, 0
    %20 = vsyncpa [#allocation10], 0
    %s21 = scalar_lea.sflag [#allocation10], 1
    %22 = vsyncpa %s21, 0
    %23 = vsyncpa [#allocation13], 0
    %24 = vsyncpa [#allocation16], 0
    %25 = vsyncpa [#allocation8], 0
    %s26 = scalar_lea.sflag [#allocation8], 1
    %27 = vsyncpa %s26, 0
    %28 = vsyncpa [#allocation20], 0
    %s29 = scalar_lea.sflag [#allocation20], 1
    %30 = vsyncpa %s29, 0
    loop: start=0, step=1, limit=4
    $region2: #{tpu_custom_call.1} parent=1 // loop_pre_header
      _
    $region3: #{tpu_custom_call.1} parent=1 // loop_header
      %s32 = sphi 0, %s36
      %p33 = scmp.ge.s32.totalorder %s32, 4
      %s39 = sphi 0, %s51
      %s40 = sphi 0, %s47
      %s41 = sphi 0, %s39
      %s42 = sphi 0, %s40
      %s43 = sphi 0, %s41
      %s44 = sphi 0, %s42
      %s56 = sphi 0, %s58
      %s59 = sphi 0, %s56
      %s60 = sphi 0, %s59
      %s76 = sphi 0, %s60
      %s82 = sphi 0, %s84
      %s85 = sphi 0, %s82
      %s86 = sphi 0, %s85
      %s102 = sphi 0, %s86
      %s110 = sphi 0, %s112
      %s113 = sphi 0, %s110
      %s114 = sphi 0, %s113
      %s130 = sphi 0, %s114
      %s136 = sphi 0, %s138
      %s139 = sphi 0, %s136
      %s140 = sphi 0, %s139
      %s156 = sphi 0, %s140
      %s160 = sphi 0, %s160
      %s162 = sphi 0, %s160
      %s163 = sphi 0, %s162
      %s177 = sphi 0, %s163
      %s181 = sphi 0, %s181
      %s183 = sphi 0, %s181
      %s184 = sphi 0, %s183
      %s198 = sphi 0, %s184
      %s202 = sphi 0, %s202
      %s204 = sphi 0, %s202
      %s205 = sphi 0, %s204
      %s219 = sphi 0, %s205
      %s223 = sphi 0, %s223
      %s225 = sphi 0, %s223
      %s226 = sphi 0, %s225
      %s240 = sphi 0, %s226
      %s244 = sphi 0, %s244
      %s246 = sphi 0, %s244
      %s247 = sphi 0, %s246
      %s261 = sphi 0, %s247
      %s269 = sphi 0, %s271
      %s272 = sphi 0, %s269
      %s273 = sphi 0, %s272
      %s289 = sphi 0, %s273
      %s295 = sphi 0, %s297
      %s298 = sphi 0, %s295
      %s299 = sphi 0, %s298
      %s315 = sphi 0, %s299
      %s323 = sphi 0, %s325
      %s326 = sphi 0, %s323
      %s327 = sphi 0, %s326
      %s343 = sphi 0, %s327
    $region4: #{tpu_custom_call.1} parent=1 // loop_header_branch
      %35 = sbr.rel (%p33) target = $region8
    $region5: #{tpu_custom_call.1} parent=1 // loop_body
      %s37 = ssub.s32 %s32, 1
      %s38 = ssub.s32 %s32, 2
      %s45 = sadd.s32 1, %s40
      %p46 = scmp.ge.s32.totalorder %s45, 1
      %s47 = scalar_select %p46, 0, %s45
      %s48 = sadd.s32 1, %s39
      %s49 = scalar_select %p46, %s48, %s39
      %p50 = scmp.ge.s32.totalorder %s49, 2
      %s51 = scalar_select %p50, 0, %s49
      %s52 = ssub.s32 %s39, %s51
      %s53 = ssub.s32 %s40, %s47
      %s54 = sor.u32 %s52, %s53
      %p55 = scmp.eq.s32.totalorder %s54, 0
      %s57 = sadd.s32 %s56, 1
      %s58 = scalar_select %p55, %s56, %s57
      %p61 = pneg %p55
      %p62 = scmp.eq.s32.totalorder %s32, 1
      %p63 = por %p61, %p62
      %p64 = scmp.ne.s32.totalorder %s56, %s59
      %p65 = scmp.eq.s32.totalorder %s32, 0
      %p66 = por %p64, %p65
      %p67 = scmp.ne.s32.totalorder %s56, %s59
      %p68 = scmp.eq.s32.totalorder %s37, 1
      %p69 = por %p67, %p68
      %p70 = scmp.ne.s32.totalorder %s59, %s60
      %p71 = scmp.eq.s32.totalorder %s37, 0
      %p72 = por %p70, %p71
      %p73 = scmp.ne.s32.totalorder %s59, %s60
      %p74 = scmp.eq.s32.totalorder %s38, 1
      %p75 = por %p73, %p74
      %p77 = scmp.ne.s32.totalorder %s60, %s76
      %p78 = scmp.eq.s32.totalorder %s38, 0
      %p79 = por %p77, %p78
      %s80 = ssub.s32 %s39, %s51
      %p81 = scmp.eq.s32.totalorder %s80, 0
      %s83 = sadd.s32 %s82, 1
      %s84 = scalar_select %p81, %s82, %s83
      %p87 = pneg %p81
      %p88 = scmp.eq.s32.totalorder %s32, 1
      %p89 = por %p87, %p88
      %p90 = scmp.ne.s32.totalorder %s82, %s85
      %p91 = scmp.eq.s32.totalorder %s32, 0
      %p92 = por %p90, %p91
      %p93 = scmp.ne.s32.totalorder %s82, %s85
      %p94 = scmp.eq.s32.totalorder %s37, 1
      %p95 = por %p93, %p94
      %p96 = scmp.ne.s32.totalorder %s85, %s86
      %p97 = scmp.eq.s32.totalorder %s37, 0
      %p98 = por %p96, %p97
      %p99 = scmp.ne.s32.totalorder %s85, %s86
      %p100 = scmp.eq.s32.totalorder %s38, 1
      %p101 = por %p99, %p100
      %p103 = scmp.ne.s32.totalorder %s86, %s102
      %p104 = scmp.eq.s32.totalorder %s38, 0
      %p105 = por %p103, %p104
      %s106 = ssub.s32 %s39, %s51
      %s107 = ssub.s32 %s40, %s47
      %s108 = sor.u32 %s106, %s107
      %p109 = scmp.eq.s32.totalorder %s108, 0
      %s111 = sadd.s32 %s110, 1
      %s112 = scalar_select %p109, %s110, %s111
      %p115 = pneg %p109
      %p116 = scmp.eq.s32.totalorder %s32, 1
      %p117 = por %p115, %p116
      %p118 = scmp.ne.s32.totalorder %s110, %s113
      %p119 = scmp.eq.s32.totalorder %s32, 0
      %p120 = por %p118, %p119
      %p121 = scmp.ne.s32.totalorder %s110, %s113
      %p122 = scmp.eq.s32.totalorder %s37, 1
      %p123 = por %p121, %p122
      %p124 = scmp.ne.s32.totalorder %s113, %s114
      %p125 = scmp.eq.s32.totalorder %s37, 0
      %p126 = por %p124, %p125
      %p127 = scmp.ne.s32.totalorder %s113, %s114
      %p128 = scmp.eq.s32.totalorder %s38, 1
      %p129 = por %p127, %p128
      %p131 = scmp.ne.s32.totalorder %s114, %s130
      %p132 = scmp.eq.s32.totalorder %s38, 0
      %p133 = por %p131, %p132
      %s134 = ssub.s32 %s40, %s47
      %p135 = scmp.eq.s32.totalorder %s134, 0
      %s137 = sadd.s32 %s136, 1
      %s138 = scalar_select %p135, %s136, %s137
      %p141 = pneg %p135
      %p142 = scmp.eq.s32.totalorder %s32, 1
      %p143 = por %p141, %p142
      %p144 = scmp.ne.s32.totalorder %s136, %s139
      %p145 = scmp.eq.s32.totalorder %s32, 0
      %p146 = por %p144, %p145
      %p147 = scmp.ne.s32.totalorder %s136, %s139
      %p148 = scmp.eq.s32.totalorder %s37, 1
      %p149 = por %p147, %p148
      %p150 = scmp.ne.s32.totalorder %s139, %s140
      %p151 = scmp.eq.s32.totalorder %s37, 0
      %p152 = por %p150, %p151
      %p153 = scmp.ne.s32.totalorder %s139, %s140
      %p154 = scmp.eq.s32.totalorder %s38, 1
      %p155 = por %p153, %p154
      %p157 = scmp.ne.s32.totalorder %s140, %s156
      %p158 = scmp.eq.s32.totalorder %s38, 0
      %p159 = por %p157, %p158
      %s161 = sadd.s32 %s160, 1
      %p164 = scmp.eq.s32.totalorder %s32, 1
      %p165 = scmp.ne.s32.totalorder %s160, %s162
      %p166 = scmp.eq.s32.totalorder %s32, 0
      %p167 = por %p165, %p166
      %p168 = scmp.ne.s32.totalorder %s160, %s162
      %p169 = scmp.eq.s32.totalorder %s37, 1
      %p170 = por %p168, %p169
      %p171 = scmp.ne.s32.totalorder %s162, %s163
      %p172 = scmp.eq.s32.totalorder %s37, 0
      %p173 = por %p171, %p172
      %p174 = scmp.ne.s32.totalorder %s162, %s163
      %p175 = scmp.eq.s32.totalorder %s38, 1
      %p176 = por %p174, %p175
      %p178 = scmp.ne.s32.totalorder %s163, %s177
      %p179 = scmp.eq.s32.totalorder %s38, 0
      %p180 = por %p178, %p179
      %s182 = sadd.s32 %s181, 1
      %p185 = scmp.eq.s32.totalorder %s32, 1
      %p186 = scmp.ne.s32.totalorder %s181, %s183
      %p187 = scmp.eq.s32.totalorder %s32, 0
      %p188 = por %p186, %p187
      %p189 = scmp.ne.s32.totalorder %s181, %s183
      %p190 = scmp.eq.s32.totalorder %s37, 1
      %p191 = por %p189, %p190
      %p192 = scmp.ne.s32.totalorder %s183, %s184
      %p193 = scmp.eq.s32.totalorder %s37, 0
      %p194 = por %p192, %p193
      %p195 = scmp.ne.s32.totalorder %s183, %s184
      %p196 = scmp.eq.s32.totalorder %s38, 1
      %p197 = por %p195, %p196
      %p199 = scmp.ne.s32.totalorder %s184, %s198
      %p200 = scmp.eq.s32.totalorder %s38, 0
      %p201 = por %p199, %p200
      %s203 = sadd.s32 %s202, 1
      %p206 = scmp.eq.s32.totalorder %s32, 1
      %p207 = scmp.ne.s32.totalorder %s202, %s204
      %p208 = scmp.eq.s32.totalorder %s32, 0
      %p209 = por %p207, %p208
      %p210 = scmp.ne.s32.totalorder %s202, %s204
      %p211 = scmp.eq.s32.totalorder %s37, 1
      %p212 = por %p210, %p211
      %p213 = scmp.ne.s32.totalorder %s204, %s205
      %p214 = scmp.eq.s32.totalorder %s37, 0
      %p215 = por %p213, %p214
      %p216 = scmp.ne.s32.totalorder %s204, %s205
      %p217 = scmp.eq.s32.totalorder %s38, 1
      %p218 = por %p216, %p217
      %p220 = scmp.ne.s32.totalorder %s205, %s219
      %p221 = scmp.eq.s32.totalorder %s38, 0
      %p222 = por %p220, %p221
      %s224 = sadd.s32 %s223, 1
      %p227 = scmp.eq.s32.totalorder %s32, 1
      %p228 = scmp.ne.s32.totalorder %s223, %s225
      %p229 = scmp.eq.s32.totalorder %s32, 0
      %p230 = por %p228, %p229
      %p231 = scmp.ne.s32.totalorder %s223, %s225
      %p232 = scmp.eq.s32.totalorder %s37, 1
      %p233 = por %p231, %p232
      %p234 = scmp.ne.s32.totalorder %s225, %s226
      %p235 = scmp.eq.s32.totalorder %s37, 0
      %p236 = por %p234, %p235
      %p237 = scmp.ne.s32.totalorder %s225, %s226
      %p238 = scmp.eq.s32.totalorder %s38, 1
      %p239 = por %p237, %p238
      %p241 = scmp.ne.s32.totalorder %s226, %s240
      %p242 = scmp.eq.s32.totalorder %s38, 0
      %p243 = por %p241, %p242
      %s245 = sadd.s32 %s244, 1
      %p248 = scmp.eq.s32.totalorder %s32, 1
      %p249 = scmp.ne.s32.totalorder %s244, %s246
      %p250 = scmp.eq.s32.totalorder %s32, 0
      %p251 = por %p249, %p250
      %p252 = scmp.ne.s32.totalorder %s244, %s246
      %p253 = scmp.eq.s32.totalorder %s37, 1
      %p254 = por %p252, %p253
      %p255 = scmp.ne.s32.totalorder %s246, %s247
      %p256 = scmp.eq.s32.totalorder %s37, 0
      %p257 = por %p255, %p256
      %p258 = scmp.ne.s32.totalorder %s246, %s247
      %p259 = scmp.eq.s32.totalorder %s38, 1
      %p260 = por %p258, %p259
      %p262 = scmp.ne.s32.totalorder %s247, %s261
      %p263 = scmp.eq.s32.totalorder %s38, 0
      %p264 = por %p262, %p263
      %s265 = ssub.s32 %s39, %s51
      %s266 = ssub.s32 %s40, %s47
      %s267 = sor.u32 %s265, %s266
      %p268 = scmp.eq.s32.totalorder %s267, 0
      %s270 = sadd.s32 %s269, 1
      %s271 = scalar_select %p268, %s269, %s270
      %p274 = pneg %p268
      %p275 = scmp.eq.s32.totalorder %s32, 1
      %p276 = por %p274, %p275
      %p277 = scmp.ne.s32.totalorder %s269, %s272
      %p278 = scmp.eq.s32.totalorder %s32, 0
      %p279 = por %p277, %p278
      %p280 = scmp.ne.s32.totalorder %s269, %s272
      %p281 = scmp.eq.s32.totalorder %s37, 1
      %p282 = por %p280, %p281
      %p283 = scmp.ne.s32.totalorder %s272, %s273
      %p284 = scmp.eq.s32.totalorder %s37, 0
      %p285 = por %p283, %p284
      %p286 = scmp.ne.s32.totalorder %s272, %s273
      %p287 = scmp.eq.s32.totalorder %s38, 1
      %p288 = por %p286, %p287
      %p290 = scmp.ne.s32.totalorder %s273, %s289
      %p291 = scmp.eq.s32.totalorder %s38, 0
      %p292 = por %p290, %p291
      %s293 = ssub.s32 %s39, %s51
      %p294 = scmp.eq.s32.totalorder %s293, 0
      %s296 = sadd.s32 %s295, 1
      %s297 = scalar_select %p294, %s295, %s296
      %p300 = pneg %p294
      %p301 = scmp.eq.s32.totalorder %s32, 1
      %p302 = por %p300, %p301
      %p303 = scmp.ne.s32.totalorder %s295, %s298
      %p304 = scmp.eq.s32.totalorder %s32, 0
      %p305 = por %p303, %p304
      %p306 = scmp.ne.s32.totalorder %s295, %s298
      %p307 = scmp.eq.s32.totalorder %s37, 1
      %p308 = por %p306, %p307
      %p309 = scmp.ne.s32.totalorder %s298, %s299
      %p310 = scmp.eq.s32.totalorder %s37, 0
      %p311 = por %p309, %p310
      %p312 = scmp.ne.s32.totalorder %s298, %s299
      %p313 = scmp.eq.s32.totalorder %s38, 1
      %p314 = por %p312, %p313
      %p316 = scmp.ne.s32.totalorder %s299, %s315
      %p317 = scmp.eq.s32.totalorder %s38, 0
      %p318 = por %p316, %p317
      %s319 = ssub.s32 %s39, %s51
      %s320 = ssub.s32 %s40, %s47
      %s321 = sor.u32 %s319, %s320
      %p322 = scmp.eq.s32.totalorder %s321, 0
      %s324 = sadd.s32 %s323, 1
      %s325 = scalar_select %p322, %s323, %s324
      %p328 = pneg %p322
      %p329 = scmp.eq.s32.totalorder %s32, 1
      %p330 = por %p328, %p329
      %p331 = scmp.ne.s32.totalorder %s323, %s326
      %p332 = scmp.eq.s32.totalorder %s32, 0
      %p333 = por %p331, %p332
      %p334 = scmp.ne.s32.totalorder %s323, %s326
      %p335 = scmp.eq.s32.totalorder %s37, 1
      %p336 = por %p334, %p335
      %p337 = scmp.ne.s32.totalorder %s326, %s327
      %p338 = scmp.eq.s32.totalorder %s37, 0
      %p339 = por %p337, %p338
      %p340 = scmp.ne.s32.totalorder %s326, %s327
      %p341 = scmp.eq.s32.totalorder %s38, 1
      %p342 = por %p340, %p341
      %p344 = scmp.ne.s32.totalorder %s327, %s343
      %p345 = scmp.eq.s32.totalorder %s38, 0
      %p346 = por %p344, %p345
      %p347 = scmp.le.s32.totalorder 1, %s32
      %p348 = scmp.lt.s32.totalorder %s32, 3
      %p349 = pnand %p347, %p348
      %p350 = pneg %p349
      // Predicated region
      $region9: #{tpu_custom_call.1} parent=5 // pred_check
        _
      $region10: #{tpu_custom_call.1} parent=5 // pred_check_branch
        %352 = sbr.rel (%p349) target = $region12
      $region11: #{tpu_custom_call.1} parent=5 // pred_region
        %s353 = ssub.s32 %s32, 1
        // Predicated region
        $region13: #{tpu_custom_call.1} parent=11 // pred_check
          %p354 = pneg %p152
        $region14: #{tpu_custom_call.1} parent=11 // pred_check_branch
          %356 = sbr.rel (%p354) target = $region16
        $region15: #{tpu_custom_call.1} parent=11 // pred_region
          %s358 = ssub.s32 128, 128
          %359 = vsyncadd [#allocation13], %s358
          %s360 = smul.addr %s42, 128
          %s361 = scalar_lea.hbm %s3, %s360
          %s363 = sshll.u32 [#allocation12], 4
          %s364 = int_to_ptr.vmem [resolvable:$true] %s363
          %366 = dma.hbm_to_vmem [thread:$0]  %s361, 128, %s364, [#allocation13]
        $region16: #{tpu_custom_call.1} parent=11 // pred_fallthru
          _
        // Predicated region
        $region17: #{tpu_custom_call.1} parent=11 // pred_check
          %p367 = pneg %p173
        $region18: #{tpu_custom_call.1} parent=11 // pred_check_branch
          %369 = sbr.rel (%p367) target = $region20
        $region19: #{tpu_custom_call.1} parent=11 // pred_region
          %s371 = ssub.s32 256, 256
          %372 = vsyncadd [#allocation13], %s371
          %s373 = sshll.u32 [#allocation14], 4
          %s374 = int_to_ptr.vmem [resolvable:$true] %s373
          %379 = dma.hbm_to_vmem [thread:$0]  %s4, 256, %s374, [#allocation13], 64, 64, 4
        $region20: #{tpu_custom_call.1} parent=11 // pred_fallthru
          _
        // Predicated region
        $region21: #{tpu_custom_call.1} parent=11 // pred_check
          %p380 = pneg %p194
        $region22: #{tpu_custom_call.1} parent=11 // pred_check_branch
          %382 = sbr.rel (%p380) target = $region24
        $region23: #{tpu_custom_call.1} parent=11 // pred_region
          %s384 = ssub.s32 256, 256
          %385 = vsyncadd [#allocation16], %s384
          %s386 = sshll.u32 [#allocation15], 4
          %s387 = int_to_ptr.vmem [resolvable:$true] %s386
          %392 = dma.hbm_to_vmem [thread:$0]  %s5, 256, %s387, [#allocation16], 64, 64, 4
        $region24: #{tpu_custom_call.1} parent=11 // pred_fallthru
          _
        // Predicated region
        $region25: #{tpu_custom_call.1} parent=11 // pred_check
          %p393 = pneg %p215
        $region26: #{tpu_custom_call.1} parent=11 // pred_check_branch
          %395 = sbr.rel (%p393) target = $region28
        $region27: #{tpu_custom_call.1} parent=11 // pred_region
          %s397 = ssub.s32 256, 256
          %398 = vsyncadd [#allocation16], %s397
          %s399 = sshll.u32 [#allocation17], 4
          %s400 = int_to_ptr.vmem [resolvable:$true] %s399
          %405 = dma.hbm_to_vmem [thread:$0]  %s6, 256, %s400, [#allocation16], 64, 64, 4
        $region28: #{tpu_custom_call.1} parent=11 // pred_fallthru
          _
        // Predicated region
        $region29: #{tpu_custom_call.1} parent=11 // pred_check
          %p406 = pneg %p236
        $region30: #{tpu_custom_call.1} parent=11 // pred_check_branch
          %408 = sbr.rel (%p406) target = $region32
        $region31: #{tpu_custom_call.1} parent=11 // pred_region
          _
        $region32: #{tpu_custom_call.1} parent=11 // pred_fallthru
          _
        // Predicated region
        $region33: #{tpu_custom_call.1} parent=11 // pred_check
          %p409 = pneg %p257
        $region34: #{tpu_custom_call.1} parent=11 // pred_check_branch
          %411 = sbr.rel (%p409) target = $region36
        $region35: #{tpu_custom_call.1} parent=11 // pred_region
          _
        $region36: #{tpu_custom_call.1} parent=11 // pred_fallthru
          _
      $region12: #{tpu_custom_call.1} parent=5 // pred_fallthru
        _
      %p412 = scmp.lt.s32.totalorder %s32, 2
      // Predicated region
      $region37: #{tpu_custom_call.1} parent=5 // pred_check
        %p413 = pneg %p412
      $region38: #{tpu_custom_call.1} parent=5 // pred_check_branch
        %415 = sbr.rel (%p413) target = $region40
      $region39: #{tpu_custom_call.1} parent=5 // pred_region
        // Predicated region
        $region41: #{tpu_custom_call.1} parent=39 // pred_check
          %p416 = pneg %p66
        $region42: #{tpu_custom_call.1} parent=39 // pred_check_branch
          %418 = sbr.rel (%p416) target = $region44
        $region43: #{tpu_custom_call.1} parent=39 // pred_region
          %s419 = sand.u32 %s56, 1
          %s420 = scalar_lea.sflag [#allocation7], %s419
          %s421 = sand.u32 %s56, 1
          %s422 = smul.addr %s421, 8
          %s423 = scalar_lea.vmem [#allocation6], %s422
          %s425 = ssub.s32 128, 128
          %426 = vsyncadd %s420, %s425
          %s427 = sadd.s32 %s40, %s39
          %s428 = smul.addr %s427, 128
          %s429 = scalar_lea.hbm %s0, %s428
          %s431 = sshll.u32 %s423, 4
          %s432 = int_to_ptr.vmem [resolvable:$true] %s431
          %434 = dma.hbm_to_vmem [thread:$0]  %s429, 128, %s432, %s420
        $region44: #{tpu_custom_call.1} parent=39 // pred_fallthru
          _
        // Predicated region
        $region45: #{tpu_custom_call.1} parent=39 // pred_check
          %p435 = pneg %p92
        $region46: #{tpu_custom_call.1} parent=39 // pred_check_branch
          %437 = sbr.rel (%p435) target = $region48
        $region47: #{tpu_custom_call.1} parent=39 // pred_region
          %s438 = sand.u32 %s32, 1
          %s439 = scalar_lea.sflag [#allocation10], %s438
          %s440 = sand.u32 %s82, 1
          %s441 = smul.addr %s440, 8
          %s442 = scalar_lea.vmem [#allocation9], %s441
          %s444 = ssub.s32 128, 128
          %445 = vsyncadd %s439, %s444
          %s446 = smul.addr %s39, 128
          %s447 = scalar_lea.hbm %s1, %s446
          %s449 = sshll.u32 %s442, 4
          %s450 = int_to_ptr.vmem [resolvable:$true] %s449
          %452 = dma.hbm_to_vmem [thread:$0]  %s447, 128, %s450, %s439
        $region48: #{tpu_custom_call.1} parent=39 // pred_fallthru
          _
        // Predicated region
        $region49: #{tpu_custom_call.1} parent=39 // pred_check
          %p453 = pneg %p120
        $region50: #{tpu_custom_call.1} parent=39 // pred_check_branch
          %455 = sbr.rel (%p453) target = $region52
        $region51: #{tpu_custom_call.1} parent=39 // pred_region
          %s456 = sand.u32 %s32, 1
          %s457 = scalar_lea.sflag [#allocation10], %s456
          %s458 = sand.u32 %s110, 1
          %s459 = smul.addr %s458, 2
          %s460 = scalar_lea.vmem [#allocation11], %s459
          %s462 = ssub.s32 32, 32
          %463 = vsyncadd %s457, %s462
          %s464 = sadd.s32 %s40, %s39
          %s465 = smul.addr %s464, 32
          %s466 = scalar_lea.hbm %s2, %s465
          %s468 = sshll.u32 %s460, 4
          %s469 = int_to_ptr.vmem [resolvable:$true] %s468
          %471 = dma.hbm_to_vmem [thread:$0]  %s466, 32, %s469, %s457
        $region52: #{tpu_custom_call.1} parent=39 // pred_fallthru
          _
      $region40: #{tpu_custom_call.1} parent=5 // pred_fallthru
        _
      %p472 = scmp.le.s32.totalorder 1, %s32
      %p473 = scmp.lt.s32.totalorder %s32, 3
      %p474 = pnand %p472, %p473
      %p475 = pneg %p474
      // Predicated region
      $region53: #{tpu_custom_call.1} parent=5 // pred_check
        _
      $region54: #{tpu_custom_call.1} parent=5 // pred_check_branch
        %477 = sbr.rel (%p474) target = $region56
      $region55: #{tpu_custom_call.1} parent=5 // pred_region
        %s478 = ssub.s32 %s32, 1
        %s479 = sand.u32 %s59, 1
        %s480 = scalar_lea.sflag [#allocation7], %s479
        %s481 = sand.u32 %s59, 1
        %s482 = smul.addr %s481, 8
        %s483 = scalar_lea.vmem [#allocation6], %s482
        // Predicated region
        $region57: #{tpu_custom_call.1} parent=55 // pred_check
          %p484 = pneg %p72
        $region58: #{tpu_custom_call.1} parent=55 // pred_check_branch
          %486 = sbr.rel (%p484) target = $region60
        $region59: #{tpu_custom_call.1} parent=55 // pred_region
          %487 = dma.done %s480, 128
        $region60: #{tpu_custom_call.1} parent=55 // pred_fallthru
          _
        %s488 = sand.u32 %s37, 1
        %s489 = scalar_lea.sflag [#allocation10], %s488
        %s490 = sand.u32 %s85, 1
        %s491 = smul.addr %s490, 8
        %s492 = scalar_lea.vmem [#allocation9], %s491
        // Predicated region
        $region61: #{tpu_custom_call.1} parent=55 // pred_check
          %p493 = pneg %p98
        $region62: #{tpu_custom_call.1} parent=55 // pred_check_branch
          %495 = sbr.rel (%p493) target = $region64
        $region63: #{tpu_custom_call.1} parent=55 // pred_region
          %496 = dma.done %s489, 128
        $region64: #{tpu_custom_call.1} parent=55 // pred_fallthru
          _
        %s497 = sand.u32 %s37, 1
        %s498 = scalar_lea.sflag [#allocation10], %s497
        %s499 = sand.u32 %s113, 1
        %s500 = smul.addr %s499, 2
        %s501 = scalar_lea.vmem [#allocation11], %s500
        // Predicated region
        $region65: #{tpu_custom_call.1} parent=55 // pred_check
          %p502 = pneg %p126
        $region66: #{tpu_custom_call.1} parent=55 // pred_check_branch
          %504 = sbr.rel (%p502) target = $region68
        $region67: #{tpu_custom_call.1} parent=55 // pred_region
          %505 = dma.done %s498, 32
        $region68: #{tpu_custom_call.1} parent=55 // pred_fallthru
          _
        // Predicated region
        $region69: #{tpu_custom_call.1} parent=55 // pred_check
          %p506 = pneg %p152
        $region70: #{tpu_custom_call.1} parent=55 // pred_check_branch
          %508 = sbr.rel (%p506) target = $region72
        $region71: #{tpu_custom_call.1} parent=55 // pred_region
          %509 = dma.done [#allocation13], 128
        $region72: #{tpu_custom_call.1} parent=55 // pred_fallthru
          _
        // Predicated region
        $region73: #{tpu_custom_call.1} parent=55 // pred_check
          %p510 = pneg %p173
        $region74: #{tpu_custom_call.1} parent=55 // pred_check_branch
          %512 = sbr.rel (%p510) target = $region76
        $region75: #{tpu_custom_call.1} parent=55 // pred_region
          %513 = dma.done [#allocation13], 256
        $region76: #{tpu_custom_call.1} parent=55 // pred_fallthru
          _
        // Predicated region
        $region77: #{tpu_custom_call.1} parent=55 // pred_check
          %p514 = pneg %p194
        $region78: #{tpu_custom_call.1} parent=55 // pred_check_branch
          %516 = sbr.rel (%p514) target = $region80
        $region79: #{tpu_custom_call.1} parent=55 // pred_region
          %517 = dma.done [#allocation16], 256
        $region80: #{tpu_custom_call.1} parent=55 // pred_fallthru
          _
        // Predicated region
        $region81: #{tpu_custom_call.1} parent=55 // pred_check
          %p518 = pneg %p215
        $region82: #{tpu_custom_call.1} parent=55 // pred_check_branch
          %520 = sbr.rel (%p518) target = $region84
        $region83: #{tpu_custom_call.1} parent=55 // pred_region
          %521 = dma.done [#allocation16], 256
        $region84: #{tpu_custom_call.1} parent=55 // pred_fallthru
          _
        %s522 = sand.u32 %s59, 1
        %s523 = scalar_lea.sflag [#allocation7], %s522
        %s524 = sand.u32 %s59, 1
        %s525 = smul.addr %s524, 8
        %s526 = scalar_lea.vmem [#allocation6], %s525
        %p527 = pneg %p72
        %p528 = pneg %p69
        %s529 = sand.u32 %s37, 1
        %s530 = scalar_lea.sflag [#allocation10], %s529
        %s531 = sand.u32 %s85, 1
        %s532 = smul.addr %s531, 8
        %s533 = scalar_lea.vmem [#allocation9], %s532
        %p534 = pneg %p98
        %p535 = pneg %p95
        %s536 = sand.u32 %s37, 1
        %s537 = scalar_lea.sflag [#allocation10], %s536
        %s538 = sand.u32 %s113, 1
        %s539 = smul.addr %s538, 2
        %s540 = scalar_lea.vmem [#allocation11], %s539
        %p541 = pneg %p126
        %p542 = pneg %p123
        %p543 = pneg %p152
        %p544 = pneg %p149
        %p545 = pneg %p173
        %p546 = pneg %p170
        %p547 = pneg %p194
        %p548 = pneg %p191
        %p549 = pneg %p215
        %p550 = pneg %p212
        %p551 = pneg %p236
        %p552 = pneg %p233
        %p553 = pneg %p257
        %p554 = pneg %p254
        %p555 = pneg %p285
        %p556 = pneg %p282
        %s557 = sand.u32 %s272, 1
        %s558 = scalar_lea.sflag [#allocation8], %s557
        %s559 = sand.u32 %s272, 1
        %s560 = smul.addr %s559, 8
        %s561 = scalar_lea.vmem [#allocation18], %s560
        %p562 = pneg %p311
        %p563 = pneg %p308
        %s564 = sand.u32 %s37, 1
        %s565 = scalar_lea.sflag [#allocation20], %s564
        %s566 = sand.u32 %s298, 1
        %s567 = smul.addr %s566, 8
        %s568 = scalar_lea.vmem [#allocation19], %s567
        %p569 = pneg %p339
        %p570 = pneg %p336
        %s571 = sand.u32 %s37, 1
        %s572 = scalar_lea.sflag [#allocation20], %s571
        %s573 = sand.u32 %s326, 1
        %s574 = smul.addr %s573, 32
        %s575 = scalar_lea.vmem [#allocation21], %s574
        %v579 = vld [vmem:[%s483] sm:$0xff]
        %v580 = vld [vmem:[%s492] sm:$0xff]
        %v581 = vld [vmem:[%s501] sm:$0x3]
        %vm582 = vnez %v581
        %v583 = vld [vmem:[#allocation12] sm:$0xff]
        %v584 = vld [vmem:[#allocation14] sm:$0xf]
        %v585 = vld [vmem:[#allocation14 + $0x4] sm:$0xf]
        %v586 = vld [vmem:[#allocation14 + $0x8] sm:$0xf]
        %v587 = vld [vmem:[#allocation14 + $0xc] sm:$0xf]
        %v588 = vld [vmem:[#allocation17] sm:$0xf]
        %v589 = vld [vmem:[#allocation17 + $0x4] sm:$0xf]
        %v590 = vld [vmem:[#allocation17 + $0x8] sm:$0xf]
        %v591 = vld [vmem:[#allocation17 + $0xc] sm:$0xf]
        %v592 = vpack.c.bf16 %v580, %v580
        %v593 = vpack.c.bf16 %v579, %v579
        %v598 = vunpack.c.l.b16 %v584
        %v599 = vunpack.c.l.b16 %v585
        %v600 = vunpack.c.l.b16 %v586
        %v601 = vunpack.c.l.b16 %v587
        %v602 = vpack.c.b16 %v599, %v598
        %v603 = vpack.c.b16 %v601, %v600
        %vm606 = vcmask 261120
        %v608 = vsel %vm606, %v593, 0
        %610 = vmatprep.subr.bf16.mxu0 0
        %611 = vmatpush1.bf16.msra.mxu0 0
        %612 = vmatprep.subr.bf16.mxu0 0
        %613 = vmatpush1.bf16.msra.mxu0 0
        %614 = vmatprep.subr.bf16.mxu0 0
        %615 = vmatpush1.bf16.msra.mxu0 0
        %616 = vmatprep.subr.bf16.mxu0 0
        %617 = vmatpush1.bf16.msra.mxu0 0
        %618 = vmatprep.subr.bf16.mxu0 0
        %619 = vmatpush1.bf16.msra.mxu0 0
        %620 = vmatprep.subr.bf16.mxu0 0
        %621 = vmatpush1.bf16.msra.mxu0 0
        %622 = vmatprep.subr.bf16.mxu0 0
        %623 = vmatpush1.bf16.msra.mxu0 %v603
        %624 = vmatprep.subr.bf16.mxu0 0
        %625 = vmatpush1.bf16.msra.mxu0 %v602
        %626 = vmatprep.subr.bf16.mxu0 0
        %627 = vmatpush2.bf16.msra.mxu0 0
        %628 = vmatprep.subr.bf16.mxu0 0
        %629 = vmatpush2.bf16.msra.mxu0 0
        %630 = vmatprep.subr.bf16.mxu0 0
        %631 = vmatpush2.bf16.msra.mxu0 0
        %632 = vmatprep.subr.bf16.mxu0 0
        %633 = vmatpush2.bf16.msra.mxu0 0
        %634 = vmatprep.subr.bf16.mxu0 0
        %635 = vmatpush2.bf16.msra.mxu0 0
        %636 = vmatprep.subr.bf16.mxu0 0
        %637 = vmatpush2.bf16.msra.mxu0 0
        %638 = vmatprep.subr.bf16.mxu0 0
        %639 = vmatpush2.bf16.msra.mxu0 0
        %640 = vmatprep.subr.bf16.mxu0 0
        %641 = vmatpush2.bf16.msra.mxu0 0
        %642 = vmatprep.mubr.bf16.mxu0 0
        %643 = vmatmul.mubr.bf16.gmra.mxu0 %v608
        %v644 = vpop.f32.mrf.mxu0
        %v645 = vadd.f32 0.0, %v644
        %v646 = vpop.f32.mrf.mxu0
        %v647 = vpop.f32.mrf.mxu0
        %v648 = vpop.f32.mrf.mxu0
        %649 = vdwg.mxu0
        %v650 = vpack.c.bf16 %v645, %v645
        %p651 = scmp.eq.s32.totalorder %s42, 0
        // Predicated region
        $region85: #{tpu_custom_call.1} parent=55 // pred_check
          %p652 = pneg %p651
        $region86: #{tpu_custom_call.1} parent=55 // pred_check_branch
          %654 = sbr.rel (%p652) target = $region88
        $region87: #{tpu_custom_call.1} parent=55 // pred_region
          %v655 = vld [vmem:[#allocation15] sm:$0xf]
          %v656 = vld [vmem:[#allocation15 + $0x4] sm:$0xf]
          %v657 = vld [vmem:[#allocation15 + $0x8] sm:$0xf]
          %v658 = vld [vmem:[#allocation15 + $0xc] sm:$0xf]
          %v663 = vunpack.c.l.b16 %v655
          %v664 = vunpack.c.l.b16 %v656
          %v665 = vunpack.c.l.b16 %v657
          %v666 = vunpack.c.l.b16 %v658
          %v667 = vpack.c.b16 %v664, %v663
          %v668 = vpack.c.b16 %v666, %v665
          %v672 = vsel %vm606, %v592, 0
          %674 = vmatprep.subr.bf16.mxu0 0
          %675 = vmatpush1.bf16.msra.mxu0 0
          %676 = vmatprep.subr.bf16.mxu0 0
          %677 = vmatpush1.bf16.msra.mxu0 0
          %678 = vmatprep.subr.bf16.mxu0 0
          %679 = vmatpush1.bf16.msra.mxu0 0
          %680 = vmatprep.subr.bf16.mxu0 0
          %681 = vmatpush1.bf16.msra.mxu0 0
          %682 = vmatprep.subr.bf16.mxu0 0
          %683 = vmatpush1.bf16.msra.mxu0 0
          %684 = vmatprep.subr.bf16.mxu0 0
          %685 = vmatpush1.bf16.msra.mxu0 0
          %686 = vmatprep.subr.bf16.mxu0 0
          %687 = vmatpush1.bf16.msra.mxu0 %v668
          %688 = vmatprep.subr.bf16.mxu0 0
          %689 = vmatpush1.bf16.msra.mxu0 %v667
          %690 = vmatprep.subr.bf16.mxu0 0
          %691 = vmatpush2.bf16.msra.mxu0 0
          %692 = vmatprep.subr.bf16.mxu0 0
          %693 = vmatpush2.bf16.msra.mxu0 0
          %694 = vmatprep.subr.bf16.mxu0 0
          %695 = vmatpush2.bf16.msra.mxu0 0
          %696 = vmatprep.subr.bf16.mxu0 0
          %697 = vmatpush2.bf16.msra.mxu0 0
          %698 = vmatprep.subr.bf16.mxu0 0
          %699 = vmatpush2.bf16.msra.mxu0 0
          %700 = vmatprep.subr.bf16.mxu0 0
          %701 = vmatpush2.bf16.msra.mxu0 0
          %702 = vmatprep.subr.bf16.mxu0 0
          %703 = vmatpush2.bf16.msra.mxu0 0
          %704 = vmatprep.subr.bf16.mxu0 0
          %705 = vmatpush2.bf16.msra.mxu0 0
          %706 = vmatprep.mubr.bf16.mxu0 0
          %707 = vmatmul.mubr.bf16.gmra.mxu0 %v672
          %v708 = vpop.f32.mrf.mxu0
          %v709 = vadd.f32 0.0, %v708
          %v710 = vpop.f32.mrf.mxu0
          %v711 = vpop.f32.mrf.mxu0
          %v712 = vpop.f32.mrf.mxu0
          %713 = vdwg.mxu0
          %vm714 = vcmask 523264
          %715 = vst.msk [vmem:[%s568] sm:$0xff] %vm714, %v709
          %717 = vrot.lane.b32.xlu0 %v580, 64
          %v718 = vpop.permute.xlu0 %717
          %vm720 = vcmask 785920
          %721 = vst.msk [vmem:[%s568] sm:$0xff] %vm720, %v718
          %v722 = vpack.c.bf16 %v709, %v709
          %vm723 = vcmask 60416
          %724 = vst.msk [vmem:[#allocation3] sm:$0xf] %vm723, %v722
          %v726 = vunpack.c.l.b16 %v722
          %v727 = vpack.c.b16 %v726, %v726
          %728 = vrot.lane.b32.xlu0 %v727, 96
          %v729 = vpop.permute.xlu0 %728
          %731 = vst.msk [vmem:[#allocation4] sm:$0xf] %vm723, %v729
          %732 = vrot.lane.b32.xlu0 %v727, 120
          %v733 = vpop.permute.xlu0 %732
          %s735 = scalar_lea.vmem [#allocation3], 4
          %736 = vst.msk [vmem:[%s735] sm:$0xf] %vm723, %v733
          %737 = vrot.lane.b32.xlu0 %v727, 88
          %v738 = vpop.permute.xlu0 %737
          %s740 = scalar_lea.vmem [#allocation4], 4
          %741 = vst.msk [vmem:[%s740] sm:$0xf] %vm723, %v738
          %742 = vrot.lane.b32.xlu0 %v727, 112
          %v743 = vpop.permute.xlu0 %742
          %s745 = scalar_lea.vmem [#allocation3], 8
          %746 = vst.msk [vmem:[%s745] sm:$0xf] %vm723, %v743
          %747 = vrot.lane.b32.xlu0 %v727, 80
          %v748 = vpop.permute.xlu0 %747
          %s750 = scalar_lea.vmem [#allocation4], 8
          %751 = vst.msk [vmem:[%s750] sm:$0xf] %vm723, %v748
          %752 = vrot.lane.b32.xlu0 %v727, 104
          %v753 = vpop.permute.xlu0 %752
          %s755 = scalar_lea.vmem [#allocation3], 12
          %756 = vst.msk [vmem:[%s755] sm:$0xf] %vm723, %v753
          %757 = vrot.lane.b32.xlu0 %v727, 72
          %v758 = vpop.permute.xlu0 %757
          %s760 = scalar_lea.vmem [#allocation4], 12
          %761 = vst.msk [vmem:[%s760] sm:$0xf] %vm723, %v758
        $region88: #{tpu_custom_call.1} parent=55 // pred_fallthru
          _
        %vm762 = vcmask 60416
        %763 = vst.msk [vmem:[#allocation2] sm:$0xf] %vm762, %v650
        %v765 = vunpack.c.l.b16 %v650
        %v766 = vpack.c.b16 %v765, %v765
        %767 = vrot.lane.b32.xlu0 %v766, 120
        %v768 = vpop.permute.xlu0 %767
        %s770 = scalar_lea.vmem [#allocation2], 4
        %771 = vst.msk [vmem:[%s770] sm:$0xf] %vm762, %v768
        %772 = vrot.lane.b32.xlu0 %v766, 112
        %v773 = vpop.permute.xlu0 %772
        %s775 = scalar_lea.vmem [#allocation2], 8
        %776 = vst.msk [vmem:[%s775] sm:$0xf] %vm762, %v773
        %777 = vrot.lane.b32.xlu0 %v766, 104
        %v778 = vpop.permute.xlu0 %777
        %s780 = scalar_lea.vmem [#allocation2], 12
        %781 = vst.msk [vmem:[%s780] sm:$0xf] %vm762, %v778
        %v782 = vld [vmem:[#allocation2] sm:$0xf]
        %v783 = vld [vmem:[#allocation2 + $0x4] sm:$0xf]
        %v784 = vld [vmem:[#allocation2 + $0x8] sm:$0xf]
        %v785 = vld [vmem:[#allocation2 + $0xc] sm:$0xf]
        %v786 = vld [vmem:[#allocation3] sm:$0xf]
        %v787 = vld [vmem:[#allocation3 + $0x4] sm:$0xf]
        %v788 = vld [vmem:[#allocation3 + $0x8] sm:$0xf]
        %v789 = vld [vmem:[#allocation3 + $0xc] sm:$0xf]
        %vm790 = vcmask 64512
        %v792 = vsel %vm790, %v782, 0
        %v795 = vsel %vm790, %v786, 0
        %797 = vmatprep.subr.bf16.mxu0 0
        %798 = vmatpush1.bf16.xpose.msra.mxu0 0
        %799 = vmatprep.subr.bf16.mxu0 0
        %800 = vmatpush1.bf16.xpose.msra.mxu0 0
        %801 = vmatprep.subr.bf16.mxu0 0
        %802 = vmatpush1.bf16.xpose.msra.mxu0 0
        %803 = vmatprep.subr.bf16.mxu0 0
        %804 = vmatpush1.bf16.xpose.msra.mxu0 0
        %805 = vmatprep.subr.bf16.mxu0 0
        %806 = vmatpush1.bf16.xpose.msra.mxu0 0
        %807 = vmatprep.subr.bf16.mxu0 0
        %808 = vmatpush1.bf16.xpose.msra.mxu0 0
        %809 = vmatprep.subr.bf16.mxu0 0
        %810 = vmatpush1.bf16.xpose.msra.mxu0 0
        %811 = vmatprep.subr.bf16.mxu0 0
        %812 = vmatpush1.bf16.xpose.msra.mxu0 %v795
        %813 = vmatprep.subr.bf16.mxu0 0
        %814 = vmatpush2.bf16.xpose.msra.mxu0 0
        %815 = vmatprep.subr.bf16.mxu0 0
        %816 = vmatpush2.bf16.xpose.msra.mxu0 0
        %817 = vmatprep.subr.bf16.mxu0 0
        %818 = vmatpush2.bf16.xpose.msra.mxu0 0
        %819 = vmatprep.subr.bf16.mxu0 0
        %820 = vmatpush2.bf16.xpose.msra.mxu0 0
        %821 = vmatprep.subr.bf16.mxu0 0
        %822 = vmatpush2.bf16.xpose.msra.mxu0 0
        %823 = vmatprep.subr.bf16.mxu0 0
        %824 = vmatpush2.bf16.xpose.msra.mxu0 0
        %825 = vmatprep.subr.bf16.mxu0 0
        %826 = vmatpush2.bf16.xpose.msra.mxu0 0
        %827 = vmatprep.subr.bf16.mxu0 0
        %828 = vmatpush2.bf16.xpose.msra.mxu0 0
        %829 = vmatprep.mubr.bf16.mxu0 0
        %830 = vmatmul.mubr.bf16.gmra.mxu0 %v792
        %v831 = vpop.f32.mrf.mxu0
        %v832 = vadd.f32 0.0, %v831
        %v833 = vpop.f32.mrf.mxu0
        %v834 = vpop.f32.mrf.mxu0
        %v835 = vpop.f32.mrf.mxu0
        %836 = vdwg.mxu0
        %v838 = vsel %vm790, %v783, 0
        %v841 = vsel %vm790, %v787, 0
        %843 = vmatprep.subr.bf16.mxu0 0
        %844 = vmatpush1.bf16.xpose.msra.mxu0 0
        %845 = vmatprep.subr.bf16.mxu0 0
        %846 = vmatpush1.bf16.xpose.msra.mxu0 0
        %847 = vmatprep.subr.bf16.mxu0 0
        %848 = vmatpush1.bf16.xpose.msra.mxu0 0
        %849 = vmatprep.subr.bf16.mxu0 0
        %850 = vmatpush1.bf16.xpose.msra.mxu0 0
        %851 = vmatprep.subr.bf16.mxu0 0
        %852 = vmatpush1.bf16.xpose.msra.mxu0 0
        %853 = vmatprep.subr.bf16.mxu0 0
        %854 = vmatpush1.bf16.xpose.msra.mxu0 0
        %855 = vmatprep.subr.bf16.mxu0 0
        %856 = vmatpush1.bf16.xpose.msra.mxu0 0
        %857 = vmatprep.subr.bf16.mxu0 0
        %858 = vmatpush1.bf16.xpose.msra.mxu0 %v841
        %859 = vmatprep.subr.bf16.mxu0 0
        %860 = vmatpush2.bf16.xpose.msra.mxu0 0
        %861 = vmatprep.subr.bf16.mxu0 0
        %862 = vmatpush2.bf16.xpose.msra.mxu0 0
        %863 = vmatprep.subr.bf16.mxu0 0
        %864 = vmatpush2.bf16.xpose.msra.mxu0 0
        %865 = vmatprep.subr.bf16.mxu0 0
        %866 = vmatpush2.bf16.xpose.msra.mxu0 0
        %867 = vmatprep.subr.bf16.mxu0 0
        %868 = vmatpush2.bf16.xpose.msra.mxu0 0
        %869 = vmatprep.subr.bf16.mxu0 0
        %870 = vmatpush2.bf16.xpose.msra.mxu0 0
        %871 = vmatprep.subr.bf16.mxu0 0
        %872 = vmatpush2.bf16.xpose.msra.mxu0 0
        %873 = vmatprep.subr.bf16.mxu0 0
        %874 = vmatpush2.bf16.xpose.msra.mxu0 0
        %875 = vmatprep.mubr.bf16.mxu0 0
        %876 = vmatmul.mubr.bf16.gmra.mxu0 %v838
        %v877 = vpop.f32.mrf.mxu0
        %v878 = vadd.f32 0.0, %v877
        %v879 = vpop.f32.mrf.mxu0
        %v880 = vpop.f32.mrf.mxu0
        %v881 = vpop.f32.mrf.mxu0
        %882 = vdwg.mxu0
        %v884 = vsel %vm790, %v784, 0
        %v887 = vsel %vm790, %v788, 0
        %889 = vmatprep.subr.bf16.mxu0 0
        %890 = vmatpush1.bf16.xpose.msra.mxu0 0
        %891 = vmatprep.subr.bf16.mxu0 0
        %892 = vmatpush1.bf16.xpose.msra.mxu0 0
        %893 = vmatprep.subr.bf16.mxu0 0
        %894 = vmatpush1.bf16.xpose.msra.mxu0 0
        %895 = vmatprep.subr.bf16.mxu0 0
        %896 = vmatpush1.bf16.xpose.msra.mxu0 0
        %897 = vmatprep.subr.bf16.mxu0 0
        %898 = vmatpush1.bf16.xpose.msra.mxu0 0
        %899 = vmatprep.subr.bf16.mxu0 0
        %900 = vmatpush1.bf16.xpose.msra.mxu0 0
        %901 = vmatprep.subr.bf16.mxu0 0
        %902 = vmatpush1.bf16.xpose.msra.mxu0 0
        %903 = vmatprep.subr.bf16.mxu0 0
        %904 = vmatpush1.bf16.xpose.msra.mxu0 %v887
        %905 = vmatprep.subr.bf16.mxu0 0
        %906 = vmatpush2.bf16.xpose.msra.mxu0 0
        %907 = vmatprep.subr.bf16.mxu0 0
        %908 = vmatpush2.bf16.xpose.msra.mxu0 0
        %909 = vmatprep.subr.bf16.mxu0 0
        %910 = vmatpush2.bf16.xpose.msra.mxu0 0
        %911 = vmatprep.subr.bf16.mxu0 0
        %912 = vmatpush2.bf16.xpose.msra.mxu0 0
        %913 = vmatprep.subr.bf16.mxu0 0
        %914 = vmatpush2.bf16.xpose.msra.mxu0 0
        %915 = vmatprep.subr.bf16.mxu0 0
        %916 = vmatpush2.bf16.xpose.msra.mxu0 0
        %917 = vmatprep.subr.bf16.mxu0 0
        %918 = vmatpush2.bf16.xpose.msra.mxu0 0
        %919 = vmatprep.subr.bf16.mxu0 0
        %920 = vmatpush2.bf16.xpose.msra.mxu0 0
        %921 = vmatprep.mubr.bf16.mxu0 0
        %922 = vmatmul.mubr.bf16.gmra.mxu0 %v884
        %v923 = vpop.f32.mrf.mxu0
        %v924 = vadd.f32 0.0, %v923
        %v925 = vpop.f32.mrf.mxu0
        %v926 = vpop.f32.mrf.mxu0
        %v927 = vpop.f32.mrf.mxu0
        %928 = vdwg.mxu0
        %v930 = vsel %vm790, %v785, 0
        %v933 = vsel %vm790, %v789, 0
        %935 = vmatprep.subr.bf16.mxu0 0
        %936 = vmatpush1.bf16.xpose.msra.mxu0 0
        %937 = vmatprep.subr.bf16.mxu0 0
        %938 = vmatpush1.bf16.xpose.msra.mxu0 0
        %939 = vmatprep.subr.bf16.mxu0 0
        %940 = vmatpush1.bf16.xpose.msra.mxu0 0
        %941 = vmatprep.subr.bf16.mxu0 0
        %942 = vmatpush1.bf16.xpose.msra.mxu0 0
        %943 = vmatprep.subr.bf16.mxu0 0
        %944 = vmatpush1.bf16.xpose.msra.mxu0 0
        %945 = vmatprep.subr.bf16.mxu0 0
        %946 = vmatpush1.bf16.xpose.msra.mxu0 0
        %947 = vmatprep.subr.bf16.mxu0 0
        %948 = vmatpush1.bf16.xpose.msra.mxu0 0
        %949 = vmatprep.subr.bf16.mxu0 0
        %950 = vmatpush1.bf16.xpose.msra.mxu0 %v933
        %951 = vmatprep.subr.bf16.mxu0 0
        %952 = vmatpush2.bf16.xpose.msra.mxu0 0
        %953 = vmatprep.subr.bf16.mxu0 0
        %954 = vmatpush2.bf16.xpose.msra.mxu0 0
        %955 = vmatprep.subr.bf16.mxu0 0
        %956 = vmatpush2.bf16.xpose.msra.mxu0 0
        %957 = vmatprep.subr.bf16.mxu0 0
        %958 = vmatpush2.bf16.xpose.msra.mxu0 0
        %959 = vmatprep.subr.bf16.mxu0 0
        %960 = vmatpush2.bf16.xpose.msra.mxu0 0
        %961 = vmatprep.subr.bf16.mxu0 0
        %962 = vmatpush2.bf16.xpose.msra.mxu0 0
        %963 = vmatprep.subr.bf16.mxu0 0
        %964 = vmatpush2.bf16.xpose.msra.mxu0 0
        %965 = vmatprep.subr.bf16.mxu0 0
        %966 = vmatpush2.bf16.xpose.msra.mxu0 0
        %967 = vmatprep.mubr.bf16.mxu0 0
        %968 = vmatmul.mubr.bf16.gmra.mxu0 %v930
        %v969 = vpop.f32.mrf.mxu0
        %v970 = vadd.f32 0.0, %v969
        %v971 = vpop.f32.mrf.mxu0
        %v972 = vpop.f32.mrf.mxu0
        %v973 = vpop.f32.mrf.mxu0
        %974 = vdwg.mxu0
        %v975 = vmul.f32 %v832, 0.35355338
        %v976 = vmul.f32 %v878, 0.35355338
        %v977 = vmul.f32 %v924, 0.35355338
        %v978 = vmul.f32 %v970, 0.35355338
        %v979 = vsel %vm582, 16843009, 0
        %v980 = vunpack.c.0.s8 %v979
        %vm981 = vcmp.ne.s32.totalorder %v980, 0
        %v982 = vsel %vm981, 1, 0
        %vm983 = vcmp.eq.s32.totalorder %v982, 1
        %v984 = vsel %vm983, -60000.0, %v975
        %v985 = vsel %vm983, -60000.0, %v976
        %v986 = vsel %vm983, -60000.0, %v977
        %v987 = vsel %vm983, -60000.0, %v978
        %988 = vst.msk [vmem:[%s575] sm:$0xff] %vm790, %v984
        %989 = vst.msk [vmem:[%s575 + $0x8] sm:$0xff] %vm790, %v985
        %990 = vst.msk [vmem:[%s575 + $0x10] sm:$0xff] %vm790, %v986
        %991 = vst.msk [vmem:[%s575 + $0x18] sm:$0xff] %vm790, %v987
        %v992 = vsel %vm790, %v984, -inf
        %993 = vmax.xlane.f32.xlu0 %v992
        %v994 = vpop.xlane.xlu0 %993
        %v995 = vsel %vm790, %v985, -inf
        %996 = vmax.xlane.f32.xlu0 %v995
        %v997 = vpop.xlane.xlu0 %996
        %v998 = vsel %vm790, %v986, -inf
        %999 = vmax.xlane.f32.xlu0 %v998
        %v1000 = vpop.xlane.xlu0 %999
        %v1001 = vsel %vm790, %v987, -inf
        %1002 = vmax.xlane.f32.xlu0 %v1001
        %v1003 = vpop.xlane.xlu0 %1002
        %v1004 = vsub.f32 %v984, %v994
        %v1005 = vsub.f32 %v985, %v997
        %v1006 = vsub.f32 %v986, %v1000
        %v1007 = vsub.f32 %v987, %v1003
        %v1008 = vmul.f32 %v1004, 1.442695
        %v1009 = vpow.pop %v1008
        %v1010 = vmul.f32 %v1005, 1.442695
        %v1011 = vpow.pop %v1010
        %v1012 = vmul.f32 %v1006, 1.442695
        %v1013 = vpow.pop %v1012
        %v1014 = vmul.f32 %v1007, 1.442695
        %v1015 = vpow.pop %v1014
        %v1016 = vsel %vm790, %v1009, 0.0
        %1017 = vadd.xlane.f32.xlu0 %v1016
        %v1018 = vpop.xlane.xlu0 %1017
        %v1019 = vsel %vm790, %v1011, 0.0
        %1020 = vadd.xlane.f32.xlu0 %v1019
        %v1021 = vpop.xlane.xlu0 %1020
        %v1022 = vsel %vm790, %v1013, 0.0
        %1023 = vadd.xlane.f32.xlu0 %v1022
        %v1024 = vpop.xlane.xlu0 %1023
        %v1025 = vsel %vm790, %v1015, 0.0
        %1026 = vadd.xlane.f32.xlu0 %v1025
        %v1027 = vpop.xlane.xlu0 %1026
        %v1028 = vrcp.pop %v1018
        %v1029 = vrcp.pop %v1021
        %v1030 = vrcp.pop %v1024
        %v1031 = vrcp.pop %v1027
        %v1032 = vmul.f32 %v1009, %v1028
        %v1033 = vmul.f32 %v1011, %v1029
        %v1034 = vmul.f32 %v1013, %v1030
        %v1035 = vmul.f32 %v1015, %v1031
        %v1036 = vpack.c.bf16 %v1032, %v1032
        %v1037 = vpack.c.bf16 %v1033, %v1033
        %v1038 = vpack.c.bf16 %v1034, %v1034
        %v1039 = vpack.c.bf16 %v1035, %v1035
        %v1040 = vld [vmem:[#allocation4] sm:$0xf]
        %v1041 = vld [vmem:[#allocation4 + $0x4] sm:$0xf]
        %v1042 = vld [vmem:[#allocation4 + $0x8] sm:$0xf]
        %v1043 = vld [vmem:[#allocation4 + $0xc] sm:$0xf]
        %v1045 = vsel %vm790, %v1036, 0
        %vm1047 = vcmask 1043456
        %v1049 = vsel %vm1047, %v1040, 0
        %1051 = vmatprep.subr.bf16.mxu0 0
        %1052 = vmatpush1.bf16.msra.mxu0 0
        %1053 = vmatprep.subr.bf16.mxu0 0
        %1054 = vmatpush1.bf16.msra.mxu0 0
        %1055 = vmatprep.subr.bf16.mxu0 0
        %1056 = vmatpush1.bf16.msra.mxu0 0
        %1057 = vmatprep.subr.bf16.mxu0 0
        %1058 = vmatpush1.bf16.msra.mxu0 0
        %1059 = vmatprep.subr.bf16.mxu0 0
        %1060 = vmatpush1.bf16.msra.mxu0 0
        %1061 = vmatprep.subr.bf16.mxu0 0
        %1062 = vmatpush1.bf16.msra.mxu0 0
        %1063 = vmatprep.subr.bf16.mxu0 0
        %1064 = vmatpush1.bf16.msra.mxu0 0
        %1065 = vmatprep.subr.bf16.mxu0 0
        %1066 = vmatpush1.bf16.msra.mxu0 %v1049
        %1067 = vmatprep.subr.bf16.mxu0 0
        %1068 = vmatpush2.bf16.msra.mxu0 0
        %1069 = vmatprep.subr.bf16.mxu0 0
        %1070 = vmatpush2.bf16.msra.mxu0 0
        %1071 = vmatprep.subr.bf16.mxu0 0
        %1072 = vmatpush2.bf16.msra.mxu0 0
        %1073 = vmatprep.subr.bf16.mxu0 0
        %1074 = vmatpush2.bf16.msra.mxu0 0
        %1075 = vmatprep.subr.bf16.mxu0 0
        %1076 = vmatpush2.bf16.msra.mxu0 0
        %1077 = vmatprep.subr.bf16.mxu0 0
        %1078 = vmatpush2.bf16.msra.mxu0 0
        %1079 = vmatprep.subr.bf16.mxu0 0
        %1080 = vmatpush2.bf16.msra.mxu0 0
        %1081 = vmatprep.subr.bf16.mxu0 0
        %1082 = vmatpush2.bf16.msra.mxu0 0
        %1083 = vmatprep.mubr.bf16.mxu0 0
        %1084 = vmatmul.mubr.bf16.gmra.mxu0 %v1045
        %v1085 = vpop.f32.mrf.mxu0
        %v1086 = vadd.f32 0.0, %v1085
        %v1087 = vpop.f32.mrf.mxu0
        %v1088 = vpop.f32.mrf.mxu0
        %v1089 = vpop.f32.mrf.mxu0
        %1090 = vdwg.mxu0
        %v1092 = vsel %vm790, %v1037, 0
        %v1095 = vsel %vm1047, %v1041, 0
        %1097 = vmatprep.subr.bf16.mxu0 0
        %1098 = vmatpush1.bf16.msra.mxu0 0
        %1099 = vmatprep.subr.bf16.mxu0 0
        %1100 = vmatpush1.bf16.msra.mxu0 0
        %1101 = vmatprep.subr.bf16.mxu0 0
        %1102 = vmatpush1.bf16.msra.mxu0 0
        %1103 = vmatprep.subr.bf16.mxu0 0
        %1104 = vmatpush1.bf16.msra.mxu0 0
        %1105 = vmatprep.subr.bf16.mxu0 0
        %1106 = vmatpush1.bf16.msra.mxu0 0
        %1107 = vmatprep.subr.bf16.mxu0 0
        %1108 = vmatpush1.bf16.msra.mxu0 0
        %1109 = vmatprep.subr.bf16.mxu0 0
        %1110 = vmatpush1.bf16.msra.mxu0 0
        %1111 = vmatprep.subr.bf16.mxu0 0
        %1112 = vmatpush1.bf16.msra.mxu0 %v1095
        %1113 = vmatprep.subr.bf16.mxu0 0
        %1114 = vmatpush2.bf16.msra.mxu0 0
        %1115 = vmatprep.subr.bf16.mxu0 0
        %1116 = vmatpush2.bf16.msra.mxu0 0
        %1117 = vmatprep.subr.bf16.mxu0 0
        %1118 = vmatpush2.bf16.msra.mxu0 0
        %1119 = vmatprep.subr.bf16.mxu0 0
        %1120 = vmatpush2.bf16.msra.mxu0 0
        %1121 = vmatprep.subr.bf16.mxu0 0
        %1122 = vmatpush2.bf16.msra.mxu0 0
        %1123 = vmatprep.subr.bf16.mxu0 0
        %1124 = vmatpush2.bf16.msra.mxu0 0
        %1125 = vmatprep.subr.bf16.mxu0 0
        %1126 = vmatpush2.bf16.msra.mxu0 0
        %1127 = vmatprep.subr.bf16.mxu0 0
        %1128 = vmatpush2.bf16.msra.mxu0 0
        %1129 = vmatprep.mubr.bf16.mxu0 0
        %1130 = vmatmul.mubr.bf16.gmra.mxu0 %v1092
        %v1131 = vpop.f32.mrf.mxu0
        %v1132 = vadd.f32 0.0, %v1131
        %v1133 = vpop.f32.mrf.mxu0
        %v1134 = vpop.f32.mrf.mxu0
        %v1135 = vpop.f32.mrf.mxu0
        %1136 = vdwg.mxu0
        %v1138 = vsel %vm790, %v1038, 0
        %v1141 = vsel %vm1047, %v1042, 0
        %1143 = vmatprep.subr.bf16.mxu0 0
        %1144 = vmatpush1.bf16.msra.mxu0 0
        %1145 = vmatprep.subr.bf16.mxu0 0
        %1146 = vmatpush1.bf16.msra.mxu0 0
        %1147 = vmatprep.subr.bf16.mxu0 0
        %1148 = vmatpush1.bf16.msra.mxu0 0
        %1149 = vmatprep.subr.bf16.mxu0 0
        %1150 = vmatpush1.bf16.msra.mxu0 0
        %1151 = vmatprep.subr.bf16.mxu0 0
        %1152 = vmatpush1.bf16.msra.mxu0 0
        %1153 = vmatprep.subr.bf16.mxu0 0
        %1154 = vmatpush1.bf16.msra.mxu0 0
        %1155 = vmatprep.subr.bf16.mxu0 0
        %1156 = vmatpush1.bf16.msra.mxu0 0
        %1157 = vmatprep.subr.bf16.mxu0 0
        %1158 = vmatpush1.bf16.msra.mxu0 %v1141
        %1159 = vmatprep.subr.bf16.mxu0 0
        %1160 = vmatpush2.bf16.msra.mxu0 0
        %1161 = vmatprep.subr.bf16.mxu0 0
        %1162 = vmatpush2.bf16.msra.mxu0 0
        %1163 = vmatprep.subr.bf16.mxu0 0
        %1164 = vmatpush2.bf16.msra.mxu0 0
        %1165 = vmatprep.subr.bf16.mxu0 0
        %1166 = vmatpush2.bf16.msra.mxu0 0
        %1167 = vmatprep.subr.bf16.mxu0 0
        %1168 = vmatpush2.bf16.msra.mxu0 0
        %1169 = vmatprep.subr.bf16.mxu0 0
        %1170 = vmatpush2.bf16.msra.mxu0 0
        %1171 = vmatprep.subr.bf16.mxu0 0
        %1172 = vmatpush2.bf16.msra.mxu0 0
        %1173 = vmatprep.subr.bf16.mxu0 0
        %1174 = vmatpush2.bf16.msra.mxu0 0
        %1175 = vmatprep.mubr.bf16.mxu0 0
        %1176 = vmatmul.mubr.bf16.gmra.mxu0 %v1138
        %v1177 = vpop.f32.mrf.mxu0
        %v1178 = vadd.f32 0.0, %v1177
        %v1179 = vpop.f32.mrf.mxu0
        %v1180 = vpop.f32.mrf.mxu0
        %v1181 = vpop.f32.mrf.mxu0
        %1182 = vdwg.mxu0
        %v1184 = vsel %vm790, %v1039, 0
        %v1187 = vsel %vm1047, %v1043, 0
        %1189 = vmatprep.subr.bf16.mxu0 0
        %1190 = vmatpush1.bf16.msra.mxu0 0
        %1191 = vmatprep.subr.bf16.mxu0 0
        %1192 = vmatpush1.bf16.msra.mxu0 0
        %1193 = vmatprep.subr.bf16.mxu0 0
        %1194 = vmatpush1.bf16.msra.mxu0 0
        %1195 = vmatprep.subr.bf16.mxu0 0
        %1196 = vmatpush1.bf16.msra.mxu0 0
        %1197 = vmatprep.subr.bf16.mxu0 0
        %1198 = vmatpush1.bf16.msra.mxu0 0
        %1199 = vmatprep.subr.bf16.mxu0 0
        %1200 = vmatpush1.bf16.msra.mxu0 0
        %1201 = vmatprep.subr.bf16.mxu0 0
        %1202 = vmatpush1.bf16.msra.mxu0 0
        %1203 = vmatprep.subr.bf16.mxu0 0
        %1204 = vmatpush1.bf16.msra.mxu0 %v1187
        %1205 = vmatprep.subr.bf16.mxu0 0
        %1206 = vmatpush2.bf16.msra.mxu0 0
        %1207 = vmatprep.subr.bf16.mxu0 0
        %1208 = vmatpush2.bf16.msra.mxu0 0
        %1209 = vmatprep.subr.bf16.mxu0 0
        %1210 = vmatpush2.bf16.msra.mxu0 0
        %1211 = vmatprep.subr.bf16.mxu0 0
        %1212 = vmatpush2.bf16.msra.mxu0 0
        %1213 = vmatprep.subr.bf16.mxu0 0
        %1214 = vmatpush2.bf16.msra.mxu0 0
        %1215 = vmatprep.subr.bf16.mxu0 0
        %1216 = vmatpush2.bf16.msra.mxu0 0
        %1217 = vmatprep.subr.bf16.mxu0 0
        %1218 = vmatpush2.bf16.msra.mxu0 0
        %1219 = vmatprep.subr.bf16.mxu0 0
        %1220 = vmatpush2.bf16.msra.mxu0 0
        %1221 = vmatprep.mubr.bf16.mxu0 0
        %1222 = vmatmul.mubr.bf16.gmra.mxu0 %v1184
        %v1223 = vpop.f32.mrf.mxu0
        %v1224 = vadd.f32 0.0, %v1223
        %v1225 = vpop.f32.mrf.mxu0
        %v1226 = vpop.f32.mrf.mxu0
        %v1227 = vpop.f32.mrf.mxu0
        %1228 = vdwg.mxu0
        %1229 = vst.msk [vmem:[#allocation5] sm:$0xff] %vm790, %v1086
        %1231 = vrot.lane.b32.xlu0 %v1132, 8
        %v1232 = vpop.permute.xlu0 %1231
        %vm1234 = vcmask 130112
        %1235 = vst.msk [vmem:[#allocation5] sm:$0xff] %vm1234, %v1232
        %1237 = vrot.lane.b32.xlu0 %v1178, 16
        %v1238 = vpop.permute.xlu0 %1237
        %vm1240 = vcmask 195712
        %1241 = vst.msk [vmem:[#allocation5] sm:$0xff] %vm1240, %v1238
        %1243 = vrot.lane.b32.xlu0 %v1224, 24
        %v1244 = vpop.permute.xlu0 %1243
        %vm1246 = vcmask 261312
        %1247 = vst.msk [vmem:[#allocation5] sm:$0xff] %vm1246, %v1244
        %v1248 = vsel %vm981, 0.0, %v583
        %v1249 = vsel %vm790, %v1248, 0.0
        %1250 = vadd.xlane.f32.xlu0 %v1249
        %v1251 = vpop.xlane.xlu0 %1250
        %v1252 = vrcp.pop %v1251
        %v1253 = vmul.f32 %v1248, %v1252
        %v1254 = vpack.c.bf16 %v1253, %v1253
        %v1256 = vsel %vm790, %v1254, 0
        %v1259 = vsel %vm1047, %v592, 0
        %1261 = vmatprep.subr.bf16.mxu0 0
        %1262 = vmatpush1.bf16.msra.mxu0 0
        %1263 = vmatprep.subr.bf16.mxu0 0
        %1264 = vmatpush1.bf16.msra.mxu0 0
        %1265 = vmatprep.subr.bf16.mxu0 0
        %1266 = vmatpush1.bf16.msra.mxu0 0
        %1267 = vmatprep.subr.bf16.mxu0 0
        %1268 = vmatpush1.bf16.msra.mxu0 0
        %1269 = vmatprep.subr.bf16.mxu0 0
        %1270 = vmatpush1.bf16.msra.mxu0 0
        %1271 = vmatprep.subr.bf16.mxu0 0
        %1272 = vmatpush1.bf16.msra.mxu0 0
        %1273 = vmatprep.subr.bf16.mxu0 0
        %1274 = vmatpush1.bf16.msra.mxu0 0
        %1275 = vmatprep.subr.bf16.mxu0 0
        %1276 = vmatpush1.bf16.msra.mxu0 %v1259
        %1277 = vmatprep.subr.bf16.mxu0 0
        %1278 = vmatpush2.bf16.msra.mxu0 0
        %1279 = vmatprep.subr.bf16.mxu0 0
        %1280 = vmatpush2.bf16.msra.mxu0 0
        %1281 = vmatprep.subr.bf16.mxu0 0
        %1282 = vmatpush2.bf16.msra.mxu0 0
        %1283 = vmatprep.subr.bf16.mxu0 0
        %1284 = vmatpush2.bf16.msra.mxu0 0
        %1285 = vmatprep.subr.bf16.mxu0 0
        %1286 = vmatpush2.bf16.msra.mxu0 0
        %1287 = vmatprep.subr.bf16.mxu0 0
        %1288 = vmatpush2.bf16.msra.mxu0 0
        %1289 = vmatprep.subr.bf16.mxu0 0
        %1290 = vmatpush2.bf16.msra.mxu0 0
        %1291 = vmatprep.subr.bf16.mxu0 0
        %1292 = vmatpush2.bf16.msra.mxu0 0
        %1293 = vmatprep.mubr.bf16.mxu0 0
        %1294 = vmatmul.mubr.bf16.gmra.mxu0 %v1256
        %v1295 = vpop.f32.mrf.mxu0
        %v1296 = vadd.f32 0.0, %v1295
        %v1297 = vpop.f32.mrf.mxu0
        %v1298 = vpop.f32.mrf.mxu0
        %v1299 = vpop.f32.mrf.mxu0
        %1300 = vdwg.mxu0
        %v1301 = vpack.c.bf16 %v1296, %v1296
        %v1306 = vunpack.c.l.b16 %v588
        %v1307 = vunpack.c.l.b16 %v589
        %v1308 = vunpack.c.l.b16 %v590
        %v1309 = vunpack.c.l.b16 %v591
        %v1310 = vpack.c.b16 %v1307, %v1306
        %v1311 = vpack.c.b16 %v1309, %v1308
        %v1315 = vsel %vm606, %v1301, 0
        %1317 = vmatprep.subr.bf16.mxu0 0
        %1318 = vmatpush1.bf16.msra.mxu0 0
        %1319 = vmatprep.subr.bf16.mxu0 0
        %1320 = vmatpush1.bf16.msra.mxu0 0
        %1321 = vmatprep.subr.bf16.mxu0 0
        %1322 = vmatpush1.bf16.msra.mxu0 0
        %1323 = vmatprep.subr.bf16.mxu0 0
        %1324 = vmatpush1.bf16.msra.mxu0 0
        %1325 = vmatprep.subr.bf16.mxu0 0
        %1326 = vmatpush1.bf16.msra.mxu0 0
        %1327 = vmatprep.subr.bf16.mxu0 0
        %1328 = vmatpush1.bf16.msra.mxu0 0
        %1329 = vmatprep.subr.bf16.mxu0 0
        %1330 = vmatpush1.bf16.msra.mxu0 %v1311
        %1331 = vmatprep.subr.bf16.mxu0 0
        %1332 = vmatpush1.bf16.msra.mxu0 %v1310
        %1333 = vmatprep.subr.bf16.mxu0 0
        %1334 = vmatpush2.bf16.msra.mxu0 0
        %1335 = vmatprep.subr.bf16.mxu0 0
        %1336 = vmatpush2.bf16.msra.mxu0 0
        %1337 = vmatprep.subr.bf16.mxu0 0
        %1338 = vmatpush2.bf16.msra.mxu0 0
        %1339 = vmatprep.subr.bf16.mxu0 0
        %1340 = vmatpush2.bf16.msra.mxu0 0
        %1341 = vmatprep.subr.bf16.mxu0 0
        %1342 = vmatpush2.bf16.msra.mxu0 0
        %1343 = vmatprep.subr.bf16.mxu0 0
        %1344 = vmatpush2.bf16.msra.mxu0 0
        %1345 = vmatprep.subr.bf16.mxu0 0
        %1346 = vmatpush2.bf16.msra.mxu0 0
        %1347 = vmatprep.subr.bf16.mxu0 0
        %1348 = vmatpush2.bf16.msra.mxu0 0
        %1349 = vmatprep.mubr.bf16.mxu0 0
        %1350 = vmatmul.mubr.bf16.gmra.mxu0 %v1315
        %v1351 = vpop.f32.mrf.mxu0
        %v1352 = vadd.f32 0.0, %v1351
        %v1353 = vpop.f32.mrf.mxu0
        %v1354 = vpop.f32.mrf.mxu0
        %v1355 = vpop.f32.mrf.mxu0
        %1356 = vdwg.mxu0
        %v1357 = vld [vmem:[#allocation5] sm:$0xff]
        %v1358 = vadd.f32 %v645, %v1357
        %v1359 = vadd.f32 %v1358, %v1352
        %v1360 = vsel %vm606, %v1359, 0.0
        %1361 = vadd.xlane.f32.xlu0 %v1360
        %v1362 = vpop.xlane.xlu0 %1361
        %v1363 = vrcp.pop 32.0
        %v1364 = vmul.f32 %v1362, %v1363
        %v1365 = vsub.f32 %v1359, %v1364
        %v1366 = vmul.f32 %v1365, %v1365
        %v1367 = vsel %vm606, %v1366, 0.0
        %1368 = vadd.xlane.f32.xlu0 %v1367
        %v1369 = vpop.xlane.xlu0 %1368
        %v1370 = vmul.f32 %v1369, %v1363
        %v1371 = vadd.f32 %v1370, 1e-05
        %v1372 = vrsqrt.pop %v1371
        %v1373 = vmul.f32 %v1365, %v1372
        %v1374 = vld [vmem:[%s7] sm:$0x1]
        %v1376 = vlaneseq
        %v1377 = vshrl.u32 %v1376, 7
        %v1378 = vsub.s32 0, %v1377
        %v1379 = vrot.slane %v1374, %v1378
        %v1381 = vmul.f32 %v1373, %v1379
        %v1382 = vld [vmem:[%s8] sm:$0x1]
        %v1384 = vlaneseq
        %v1385 = vshrl.u32 %v1384, 7
        %v1386 = vsub.s32 0, %v1385
        %v1387 = vrot.slane %v1382, %v1386
        %v1389 = vadd.f32 %v1381, %v1387
        %1390 = vst.msk [vmem:[%s561] sm:$0xff] %vm606, %v1389
        %s1391 = sand.u32 %s272, 1
        %s1392 = scalar_lea.sflag [#allocation8], %s1391
        %s1393 = sand.u32 %s272, 1
        %s1394 = smul.addr %s1393, 8
        %s1395 = scalar_lea.vmem [#allocation18], %s1394
        %s1396 = sand.u32 %s37, 1
        %s1397 = scalar_lea.sflag [#allocation20], %s1396
        %s1398 = sand.u32 %s298, 1
        %s1399 = smul.addr %s1398, 8
        %s1400 = scalar_lea.vmem [#allocation19], %s1399
        %s1401 = sand.u32 %s37, 1
        %s1402 = scalar_lea.sflag [#allocation20], %s1401
        %s1403 = sand.u32 %s326, 1
        %s1404 = smul.addr %s1403, 32
        %s1405 = scalar_lea.vmem [#allocation21], %s1404
        // Predicated region
        $region89: #{tpu_custom_call.1} parent=55 // pred_check
          %p1406 = pneg %p282
        $region90: #{tpu_custom_call.1} parent=55 // pred_check_branch
          %1408 = sbr.rel (%p1406) target = $region92
        $region91: #{tpu_custom_call.1} parent=55 // pred_region
          %s1410 = ssub.s32 128, 128
          %1411 = vsyncadd %s1392, %s1410
          %s1412 = sadd.s32 %s42, %s41
          %s1413 = smul.addr %s1412, 128
          %s1414 = scalar_lea.hbm %s9, %s1413
          %s1416 = sshll.u32 %s1395, 4
          %s1417 = int_to_ptr.vmem [resolvable:$true] %s1416
          %1419 = dma.vmem_to_hbm [thread:$0]  %s1417, 128, %s1414, %s1392
        $region92: #{tpu_custom_call.1} parent=55 // pred_fallthru
          _
        // Predicated region
        $region93: #{tpu_custom_call.1} parent=55 // pred_check
          %p1420 = pneg %p308
        $region94: #{tpu_custom_call.1} parent=55 // pred_check_branch
          %1422 = sbr.rel (%p1420) target = $region96
        $region95: #{tpu_custom_call.1} parent=55 // pred_region
          %s1424 = ssub.s32 128, 128
          %1425 = vsyncadd %s1397, %s1424
          %s1426 = smul.addr %s41, 128
          %s1427 = scalar_lea.hbm %s10, %s1426
          %s1429 = sshll.u32 %s1400, 4
          %s1430 = int_to_ptr.vmem [resolvable:$true] %s1429
          %1432 = dma.vmem_to_hbm [thread:$0]  %s1430, 128, %s1427, %s1397
        $region96: #{tpu_custom_call.1} parent=55 // pred_fallthru
          _
        // Predicated region
        $region97: #{tpu_custom_call.1} parent=55 // pred_check
          %p1433 = pneg %p336
        $region98: #{tpu_custom_call.1} parent=55 // pred_check_branch
          %1435 = sbr.rel (%p1433) target = $region100
        $region99: #{tpu_custom_call.1} parent=55 // pred_region
          %s1437 = ssub.s32 512, 512
          %1438 = vsyncadd %s1402, %s1437
          %s1439 = smul.addr %s41, 4
          %s1440 = sadd.s32 %s42, %s1439
          %s1441 = smul.addr %s1440, 128
          %s1442 = scalar_lea.hbm %s11, %s1441
          %s1443 = sshll.u32 %s1405, 4
          %s1444 = int_to_ptr.vmem [resolvable:$true] %s1443
          %1449 = dma.vmem_to_hbm [thread:$0]  %s1444, 512, %s1442, %s1402, 128, 128, 8
        $region100: #{tpu_custom_call.1} parent=55 // pred_fallthru
          _
      $region56: #{tpu_custom_call.1} parent=5 // pred_fallthru
        _
      %p1450 = scmp.le.s32.totalorder 2, %s32
      // Predicated region
      $region101: #{tpu_custom_call.1} parent=5 // pred_check
        %p1451 = pneg %p1450
      $region102: #{tpu_custom_call.1} parent=5 // pred_check_branch
        %1453 = sbr.rel (%p1451) target = $region104
      $region103: #{tpu_custom_call.1} parent=5 // pred_region
        %s1454 = ssub.s32 %s32, 2
        // Predicated region
        $region105: #{tpu_custom_call.1} parent=103 // pred_check
          %p1455 = pneg %p288
        $region106: #{tpu_custom_call.1} parent=103 // pred_check_branch
          %1457 = sbr.rel (%p1455) target = $region108
        $region107: #{tpu_custom_call.1} parent=103 // pred_region
          %s1458 = sand.u32 %s273, 1
          %s1459 = scalar_lea.sflag [#allocation8], %s1458
          %s1460 = sand.u32 %s273, 1
          %s1461 = smul.addr %s1460, 8
          %s1462 = scalar_lea.vmem [#allocation18], %s1461
          %1463 = dma.done %s1459, 128
        $region108: #{tpu_custom_call.1} parent=103 // pred_fallthru
          _
        // Predicated region
        $region109: #{tpu_custom_call.1} parent=103 // pred_check
          %p1464 = pneg %p314
        $region110: #{tpu_custom_call.1} parent=103 // pred_check_branch
          %1466 = sbr.rel (%p1464) target = $region112
        $region111: #{tpu_custom_call.1} parent=103 // pred_region
          %s1467 = sand.u32 %s38, 1
          %s1468 = scalar_lea.sflag [#allocation20], %s1467
          %s1469 = sand.u32 %s299, 1
          %s1470 = smul.addr %s1469, 8
          %s1471 = scalar_lea.vmem [#allocation19], %s1470
          %1472 = dma.done %s1468, 128
        $region112: #{tpu_custom_call.1} parent=103 // pred_fallthru
          _
        // Predicated region
        $region113: #{tpu_custom_call.1} parent=103 // pred_check
          %p1473 = pneg %p342
        $region114: #{tpu_custom_call.1} parent=103 // pred_check_branch
          %1475 = sbr.rel (%p1473) target = $region116
        $region115: #{tpu_custom_call.1} parent=103 // pred_region
          %s1476 = sand.u32 %s38, 1
          %s1477 = scalar_lea.sflag [#allocation20], %s1476
          %s1478 = sand.u32 %s327, 1
          %s1479 = smul.addr %s1478, 32
          %s1480 = scalar_lea.vmem [#allocation21], %s1479
          %1481 = dma.done %s1477, 512
        $region116: #{tpu_custom_call.1} parent=103 // pred_fallthru
          _
      $region104: #{tpu_custom_call.1} parent=5 // pred_fallthru
        _
    $region6: #{tpu_custom_call.1} parent=1 // loop_footer
      %s36 = sadd.s32 1, %s32
    $region7: #{tpu_custom_call.1} parent=1 // loop_footer_branch
      %31 = sbr.rel target = $region3
    $region8: #{tpu_custom_call.1} parent=1 // loop_exit
      _
    %1482 = vsyncpa [#allocation7], 1
    %s1483 = scalar_lea.sflag [#allocation7], 1
    %1484 = vsyncpa %s1483, 1
    %1485 = vsyncpa [#allocation10], 1
    %s1486 = scalar_lea.sflag [#allocation10], 1
    %1487 = vsyncpa %s1486, 1
    %1488 = vsyncpa [#allocation13], 1
    %1489 = vsyncpa [#allocation16], 1
    %1490 = vsyncpa [#allocation8], 1
    %s1491 = scalar_lea.sflag [#allocation8], 1
    %1492 = vsyncpa %s1491, 1
    %1493 = vsyncpa [#allocation20], 1
    %s1494 = scalar_lea.sflag [#allocation20], 1
    %1495 = vsyncpa %s1494, 1

</llo_original>
